<compile_context>
chip_gen: v7x
topology: tpu7x:2x2x1
jax: 0.10.0
libtpu: 0.0.40
codegen_flags: <defaults>
</compile_context>

<pallas_src>
import jax
import jax.numpy as jnp
from jax.experimental import pallas as pl
from jax.experimental.pallas import tpu as pltpu

# ---------------- config (small, consistent with the module) ----------------
B = 2            # batch size
S = 8            # sequence length
H = 32           # hidden_size
VOCAB = 64       # vocab size for the stand-in embedding table
ROW_BLOCK = 8    # rows per grid step (f32 sublane multiple)
# Set to jnp.bfloat16 on v6e/v7x at real sizes (accumulation stays f32).
MXU_DTYPE = jnp.float32


# ---------------------------------------------------------------------------
# Kernel 1: per-(choice, row-block) encoder + COPA head score.
#   - embedding rows gathered from HBM by per-row DMA (ids from SMEM prefetch)
#   - stand-in encoder: tanh(x @ W_enc + b_enc)
#   - head: sum(h * w_lin, -1) + b_lin  ->  one score per row
# Output scores have shape (2, B_pad, 1); the choice axis is placed by the
# out_spec index_map (this is the torch.cat(axis=1)).
# ---------------------------------------------------------------------------
def copa_encoder_kernel(ids_ref, emb_hbm, w_enc_ref, b_enc_ref, w_lin_ref,
                        b_lin_ref, scores_ref, emb_buf, copy_sems):
    c = pl.program_id(0)               # choice index (0 or 1)
    blk = pl.program_id(1)             # row-block index within the batch
    row_block = emb_buf.shape[0]
    base = blk * row_block

    # Row gather: table stays in HBM, only the needed rows move
    # (O(rows * H) bytes instead of O(VOCAB * H)).
    for r in range(row_block):
        row_id = ids_ref[c, base + r]
        pltpu.make_async_copy(emb_hbm.at[pl.ds(row_id, 1), :],
                              emb_buf.at[pl.ds(r, 1), :],
                              copy_sems.at[r]).start()
    for r in range(row_block):
        pltpu.make_async_copy(emb_hbm.at[pl.ds(0, 1), :],
                              emb_buf.at[pl.ds(r, 1), :],
                              copy_sems.at[r]).wait()

    # Stand-in LM encoder.
    # TODO(synk): real CopaModel backbone (_lm.model transformer) not modeled.
    emb = emb_buf[...]
    h = jnp.tanh(
        jnp.dot(emb.astype(MXU_DTYPE), w_enc_ref[...].astype(MXU_DTYPE),
                preferred_element_type=jnp.float32)
        + b_enc_ref[...])

    # TODO(synk): training-mode Dropout(p=hidden_dropout_prob) not modeled
    # (eval-mode identity, matching module.eval()).

    # COPA head, H -> 1: VPU multiply + lane reduce.
    s = jnp.sum(h * w_lin_ref[...], axis=-1, keepdims=True) + b_lin_ref[...]
    scores_ref[...] = s                # (ROW_BLOCK, 1)


def run_copa_encoder(ids_pad, params):
    two, b_pad = ids_pad.shape
    num_blocks = b_pad // ROW_BLOCK
    grid_spec = pltpu.PrefetchScalarGridSpec(
        num_scalar_prefetch=1,                      # cls ids -> SMEM
        grid=(two, num_blocks),
        in_specs=[
            pl.BlockSpec(memory_space=pl.ANY),              # emb table in HBM
            pl.BlockSpec((H, H), lambda c, i, ids: (0, 0)),  # w_enc (resident)
            pl.BlockSpec((1, H), lambda c, i, ids: (0, 0)),  # b_enc
            pl.BlockSpec((1, H), lambda c, i, ids: (0, 0)),  # w_lin
            pl.BlockSpec((1, 1), lambda c, i, ids: (0, 0)),  # b_lin
        ],
        out_specs=pl.BlockSpec((None, ROW_BLOCK, 1),
                               lambda c, i, ids: (c, i, 0)),
        scratch_shapes=[
            pltpu.VMEM((ROW_BLOCK, H), jnp.float32),         # gathered rows
            pltpu.SemaphoreType.DMA((ROW_BLOCK,)),
        ],
    )
    return pl.pallas_call(
        copa_encoder_kernel,
        out_shape=jax.ShapeDtypeStruct((two, b_pad, 1), jnp.float32),
        grid_spec=grid_spec,
        compiler_params=pltpu.CompilerParams(
            dimension_semantics=("parallel", "parallel")),
    )(ids_pad, params["emb_table"], params["w_enc"], params["b_enc"],
      params["w_lin"], params["b_lin"])


# ---------------------------------------------------------------------------
# Kernel 2: tiny (O(B)) logits assembly + cross-entropy (mean reduction),
# matching nn.CrossEntropyLoss.
# ---------------------------------------------------------------------------
def copa_loss_kernel(scores_ref, labels_ref, logits_ref, loss_ref):
    b = logits_ref.shape[0]
    s = scores_ref[...]                      # (2, B_pad, 1)
    s0 = s[0, :b, :]                         # choice 1 scores (b, 1)
    s1 = s[1, :b, :]                         # choice 2 scores (b, 1)

    col = jax.lax.broadcasted_iota(jnp.int32, (b, 2), 1)
    logits = jnp.where(col == 0, s0, s1)     # (b, 2): [choice1, choice2]
    logits_ref[...] = logits

    m = jnp.max(logits, axis=-1, keepdims=True)
    lse = m + jnp.log(jnp.sum(jnp.exp(logits - m), axis=-1, keepdims=True))
    onehot = (col == labels_ref[...]).astype(jnp.float32)   # single compare
    picked = jnp.sum(onehot * logits, axis=-1, keepdims=True)
    loss_ref[0, 0] = jnp.mean(lse - picked)


def run_copa_loss(scores, labels):
    b = labels.shape[0]
    two, b_pad, _ = scores.shape
    labels2d = labels.reshape(b, 1).astype(jnp.int32)
    logits, loss = pl.pallas_call(
        copa_loss_kernel,
        out_shape=(jax.ShapeDtypeStruct((b, 2), jnp.float32),
                   jax.ShapeDtypeStruct((1, 1), jnp.float32)),
        in_specs=[
            pl.BlockSpec((two, b_pad, 1), lambda: (0, 0, 0)),
            pl.BlockSpec((b, 1), lambda: (0, 0)),
        ],
        out_specs=(
            pl.BlockSpec((b, 2), lambda: (0, 0)),
            pl.BlockSpec((1, 1), lambda: (0, 0)),
        ),
    )(scores, labels2d)
    return logits, loss[0, 0]


# ---------------------------------------------------------------------------
# CopaModel forward (wrapper is only index plumbing; compute is in kernels).
# ---------------------------------------------------------------------------
def copa_forward(batch, params):
    (ids1, mask1), (ids2, mask2), labels = batch
    # TODO(synk): attention_mask only matters inside a real attention LM; the
    # per-token stand-in encoder accepts it but does not use it.
    del mask1, mask2
    b = ids1.shape[0]
    b_pad = ROW_BLOCK * pl.cdiv(b, ROW_BLOCK)
    cls1 = jnp.clip(ids1[:, 0].astype(jnp.int32), 0, VOCAB - 1)
    cls2 = jnp.clip(ids2[:, 0].astype(jnp.int32), 0, VOCAB - 1)
    ids_pad = jnp.zeros((2, b_pad), jnp.int32)
    ids_pad = ids_pad.at[0, :b].set(cls1).at[1, :b].set(cls2)

    scores = run_copa_encoder(ids_pad, params)        # (2, B_pad, 1)
    logits, loss = run_copa_loss(scores, labels)
    return logits, loss, labels


# ---------------------------------------------------------------------------
def make_params(key):
    k1, k2, k3, k4, k5 = jax.random.split(key, 5)
    return {
        "emb_table": jax.random.normal(k1, (VOCAB, H), jnp.float32) * 0.02,
        "w_enc": jax.random.normal(k2, (H, H), jnp.float32) * (1.0 / jnp.sqrt(H)),
        "b_enc": jax.random.normal(k3, (1, H), jnp.float32) * 0.02,
        # nn.Linear(hidden_size, 1): weight (1, H), bias stored as (1, 1)
        "w_lin": jax.random.normal(k4, (1, H), jnp.float32) * (1.0 / jnp.sqrt(H)),
        "b_lin": jax.random.normal(k5, (1, 1), jnp.float32) * 0.02,
    }


def reference_forward(batch, params):
    """Pure-JAX reference of the same forward (numerical sanity check)."""
    (ids1, _), (ids2, _), labels = batch

    def enc_cls(ids):
        e = jnp.take(params["emb_table"], ids[:, 0], axis=0)
        return jnp.tanh(e @ params["w_enc"] + params["b_enc"])

    c1, c2 = enc_cls(ids1), enc_cls(ids2)
    l1 = jnp.sum(c1 * params["w_lin"], axis=-1, keepdims=True) + params["b_lin"]
    l2 = jnp.sum(c2 * params["w_lin"], axis=-1, keepdims=True) + params["b_lin"]
    logits = jnp.concatenate([l1, l2], axis=1)
    m = jnp.max(logits, axis=-1, keepdims=True)
    lse = m + jnp.log(jnp.sum(jnp.exp(logits - m), axis=-1, keepdims=True))
    picked = jnp.take_along_axis(logits, labels.astype(jnp.int32)[:, None], axis=1)
    return logits, jnp.mean(lse - picked)


if __name__ == "__main__":
    key = jax.random.PRNGKey(0)
    kp, ka, kb, kl = jax.random.split(key, 4)
    params = make_params(kp)

    ids1 = jax.random.randint(ka, (B, S), 0, VOCAB, dtype=jnp.int32)
    ids2 = jax.random.randint(kb, (B, S), 0, VOCAB, dtype=jnp.int32)
    mask1 = jnp.ones((B, S), jnp.int32)
    mask2 = jnp.ones((B, S), jnp.int32)
    labels = jax.random.randint(kl, (B,), 0, 2, dtype=jnp.int32)

    batch = ((ids1, mask1), (ids2, mask2), labels)
    logits, loss, out_labels = copa_forward(batch, params)
    jax.block_until_ready((logits, loss, out_labels))

    assert logits.shape == (B, 2)
    assert loss.shape == ()

    ref_logits, ref_loss = reference_forward(batch, params)
    assert jnp.allclose(logits, ref_logits, rtol=2e-3, atol=2e-3)
    assert jnp.allclose(loss, ref_loss, rtol=2e-3, atol=2e-3)

    print("KERNEL_OK")
</pallas_src>

<mosaic_0001>
module attributes {stable_mosaic.version = 11 : i64} {
  func.func @copa_encoder_kernel(%arg0: i32, %arg1: i32, %arg2: memref<2x8xi32, #tpu.memory_space<smem>>, %arg3: memref<64x32xf32, #tpu.memory_space<any>>, %arg4: memref<32x32xf32, #tpu.memory_space<vmem>>, %arg5: memref<1x32xf32, #tpu.memory_space<vmem>>, %arg6: memref<1x32xf32, #tpu.memory_space<vmem>>, %arg7: memref<1x1xf32, #tpu.memory_space<vmem>>, %arg8: memref<1x8x1xf32, #tpu.memory_space<vmem>>, %arg9: memref<8x32xf32, #tpu.memory_space<vmem>>, %arg10: memref<8x!tpu.dma_semaphore, #tpu.memory_space<semaphore_mem>>) attributes {dimension_semantics = [#tpu.dimension_semantics<parallel>, #tpu.dimension_semantics<parallel>], iteration_bounds = array<i64: 2, 1>, scalar_prefetch = 1 : i64, scratch_operands = 2 : i64, tpu.core_type = #tpu.core_type<tc>, window_params = [{}, {pipeline_mode = #tpu.pipeline_mode<synchronous>, transform_indices = @transform_1, window_bounds = array<i64: 32, 32>}, {pipeline_mode = #tpu.pipeline_mode<synchronous>, transform_indices = @transform_2, window_bounds = array<i64: 1, 32>}, {pipeline_mode = #tpu.pipeline_mode<synchronous>, transform_indices = @transform_3, window_bounds = array<i64: 1, 32>}, {pipeline_mode = #tpu.pipeline_mode<synchronous>, transform_indices = @transform_4, window_bounds = array<i64: 1, 1>}, {transform_indices = @transform_5, window_bounds = array<i64: 1, 8, 1>}]} {
    %c8_i32 = arith.constant 8 : i32
    %0 = arith.muli %arg1, %c8_i32 : i32
    %c0_i32 = arith.constant 0 : i32
    %1 = arith.addi %0, %c0_i32 : i32
    %2 = arith.index_cast %arg0 : i32 to index
    %3 = arith.index_cast %1 : i32 to index
    %4 = memref.load %arg2[%2, %3] : memref<2x8xi32, #tpu.memory_space<smem>>
    %c0_i32_0 = arith.constant 0 : i32
    %c0_i32_1 = arith.constant 0 : i32
    %5 = tpu.memref_slice %arg3[%4, %c0_i32_1] : memref<64x32xf32, #tpu.memory_space<any>> -> memref<1x32xf32, #tpu.memory_space<any>>
    %c0_i32_2 = arith.constant 0 : i32
    %c0_i32_3 = arith.constant 0 : i32
    %6 = tpu.memref_slice %arg9[%c0_i32_2, %c0_i32_3] : memref<8x32xf32, #tpu.memory_space<vmem>> -> memref<1x32xf32, #tpu.memory_space<vmem>>
    %7 = tpu.memref_slice %arg10[%c0_i32_0] : memref<8x!tpu.dma_semaphore, #tpu.memory_space<semaphore_mem>> -> memref<1x!tpu.dma_semaphore, #tpu.memory_space<semaphore_mem>>
    %8 = tpu.memref_squeeze %7 : memref<1x!tpu.dma_semaphore, #tpu.memory_space<semaphore_mem>> -> memref<!tpu.dma_semaphore, #tpu.memory_space<semaphore_mem>>
    tpu.enqueue_dma source(%5 : memref<1x32xf32, #tpu.memory_space<any>>) target(%6 : memref<1x32xf32, #tpu.memory_space<vmem>>) target_semaphore(%8 : memref<!tpu.dma_semaphore, #tpu.memory_space<semaphore_mem>>)
    %c1_i32 = arith.constant 1 : i32
    %9 = arith.addi %0, %c1_i32 : i32
    %10 = arith.index_cast %arg0 : i32 to index
    %11 = arith.index_cast %9 : i32 to index
    %12 = memref.load %arg2[%10, %11] : memref<2x8xi32, #tpu.memory_space<smem>>
    %c1_i32_4 = arith.constant 1 : i32
    %c0_i32_5 = arith.constant 0 : i32
    %13 = tpu.memref_slice %arg3[%12, %c0_i32_5] : memref<64x32xf32, #tpu.memory_space<any>> -> memref<1x32xf32, #tpu.memory_space<any>>
    %c1_i32_6 = arith.constant 1 : i32
    %c0_i32_7 = arith.constant 0 : i32
    %14 = tpu.memref_slice %arg9[%c1_i32_6, %c0_i32_7] : memref<8x32xf32, #tpu.memory_space<vmem>> -> memref<1x32xf32, #tpu.memory_space<vmem>>
    %15 = tpu.memref_slice %arg10[%c1_i32_4] : memref<8x!tpu.dma_semaphore, #tpu.memory_space<semaphore_mem>> -> memref<1x!tpu.dma_semaphore, #tpu.memory_space<semaphore_mem>>
    %16 = tpu.memref_squeeze %15 : memref<1x!tpu.dma_semaphore, #tpu.memory_space<semaphore_mem>> -> memref<!tpu.dma_semaphore, #tpu.memory_space<semaphore_mem>>
    tpu.enqueue_dma source(%13 : memref<1x32xf32, #tpu.memory_space<any>>) target(%14 : memref<1x32xf32, #tpu.memory_space<vmem>>) target_semaphore(%16 : memref<!tpu.dma_semaphore, #tpu.memory_space<semaphore_mem>>)
    %c2_i32 = arith.constant 2 : i32
    %17 = arith.addi %0, %c2_i32 : i32
    %18 = arith.index_cast %arg0 : i32 to index
    %19 = arith.index_cast %17 : i32 to index
    %20 = memref.load %arg2[%18, %19] : memref<2x8xi32, #tpu.memory_space<smem>>
    %c2_i32_8 = arith.constant 2 : i32
    %c0_i32_9 = arith.constant 0 : i32
    %21 = tpu.memref_slice %arg3[%20, %c0_i32_9] : memref<64x32xf32, #tpu.memory_space<any>> -> memref<1x32xf32, #tpu.memory_space<any>>
    %c2_i32_10 = arith.constant 2 : i32
    %c0_i32_11 = arith.constant 0 : i32
    %22 = tpu.memref_slice %arg9[%c2_i32_10, %c0_i32_11] : memref<8x32xf32, #tpu.memory_space<vmem>> -> memref<1x32xf32, #tpu.memory_space<vmem>>
    %23 = tpu.memref_slice %arg10[%c2_i32_8] : memref<8x!tpu.dma_semaphore, #tpu.memory_space<semaphore_mem>> -> memref<1x!tpu.dma_semaphore, #tpu.memory_space<semaphore_mem>>
    %24 = tpu.memref_squeeze %23 : memref<1x!tpu.dma_semaphore, #tpu.memory_space<semaphore_mem>> -> memref<!tpu.dma_semaphore, #tpu.memory_space<semaphore_mem>>
    tpu.enqueue_dma source(%21 : memref<1x32xf32, #tpu.memory_space<any>>) target(%22 : memref<1x32xf32, #tpu.memory_space<vmem>>) target_semaphore(%24 : memref<!tpu.dma_semaphore, #tpu.memory_space<semaphore_mem>>)
    %c3_i32 = arith.constant 3 : i32
    %25 = arith.addi %0, %c3_i32 : i32
    %26 = arith.index_cast %arg0 : i32 to index
    %27 = arith.index_cast %25 : i32 to index
    %28 = memref.load %arg2[%26, %27] : memref<2x8xi32, #tpu.memory_space<smem>>
    %c3_i32_12 = arith.constant 3 : i32
    %c0_i32_13 = arith.constant 0 : i32
    %29 = tpu.memref_slice %arg3[%28, %c0_i32_13] : memref<64x32xf32, #tpu.memory_space<any>> -> memref<1x32xf32, #tpu.memory_space<any>>
    %c3_i32_14 = arith.constant 3 : i32
    %c0_i32_15 = arith.constant 0 : i32
    %30 = tpu.memref_slice %arg9[%c3_i32_14, %c0_i32_15] : memref<8x32xf32, #tpu.memory_space<vmem>> -> memref<1x32xf32, #tpu.memory_space<vmem>>
    %31 = tpu.memref_slice %arg10[%c3_i32_12] : memref<8x!tpu.dma_semaphore, #tpu.memory_space<semaphore_mem>> -> memref<1x!tpu.dma_semaphore, #tpu.memory_space<semaphore_mem>>
    %32 = tpu.memref_squeeze %31 : memref<1x!tpu.dma_semaphore, #tpu.memory_space<semaphore_mem>> -> memref<!tpu.dma_semaphore, #tpu.memory_space<semaphore_mem>>
    tpu.enqueue_dma source(%29 : memref<1x32xf32, #tpu.memory_space<any>>) target(%30 : memref<1x32xf32, #tpu.memory_space<vmem>>) target_semaphore(%32 : memref<!tpu.dma_semaphore, #tpu.memory_space<semaphore_mem>>)
    %c4_i32 = arith.constant 4 : i32
    %33 = arith.addi %0, %c4_i32 : i32
    %34 = arith.index_cast %arg0 : i32 to index
    %35 = arith.index_cast %33 : i32 to index
    %36 = memref.load %arg2[%34, %35] : memref<2x8xi32, #tpu.memory_space<smem>>
    %c4_i32_16 = arith.constant 4 : i32
    %c0_i32_17 = arith.constant 0 : i32
    %37 = tpu.memref_slice %arg3[%36, %c0_i32_17] : memref<64x32xf32, #tpu.memory_space<any>> -> memref<1x32xf32, #tpu.memory_space<any>>
    %c4_i32_18 = arith.constant 4 : i32
    %c0_i32_19 = arith.constant 0 : i32
    %38 = tpu.memref_slice %arg9[%c4_i32_18, %c0_i32_19] : memref<8x32xf32, #tpu.memory_space<vmem>> -> memref<1x32xf32, #tpu.memory_space<vmem>>
    %39 = tpu.memref_slice %arg10[%c4_i32_16] : memref<8x!tpu.dma_semaphore, #tpu.memory_space<semaphore_mem>> -> memref<1x!tpu.dma_semaphore, #tpu.memory_space<semaphore_mem>>
    %40 = tpu.memref_squeeze %39 : memref<1x!tpu.dma_semaphore, #tpu.memory_space<semaphore_mem>> -> memref<!tpu.dma_semaphore, #tpu.memory_space<semaphore_mem>>
    tpu.enqueue_dma source(%37 : memref<1x32xf32, #tpu.memory_space<any>>) target(%38 : memref<1x32xf32, #tpu.memory_space<vmem>>) target_semaphore(%40 : memref<!tpu.dma_semaphore, #tpu.memory_space<semaphore_mem>>)
    %c5_i32 = arith.constant 5 : i32
    %41 = arith.addi %0, %c5_i32 : i32
    %42 = arith.index_cast %arg0 : i32 to index
    %43 = arith.index_cast %41 : i32 to index
    %44 = memref.load %arg2[%42, %43] : memref<2x8xi32, #tpu.memory_space<smem>>
    %c5_i32_20 = arith.constant 5 : i32
    %c0_i32_21 = arith.constant 0 : i32
    %45 = tpu.memref_slice %arg3[%44, %c0_i32_21] : memref<64x32xf32, #tpu.memory_space<any>> -> memref<1x32xf32, #tpu.memory_space<any>>
    %c5_i32_22 = arith.constant 5 : i32
    %c0_i32_23 = arith.constant 0 : i32
    %46 = tpu.memref_slice %arg9[%c5_i32_22, %c0_i32_23] : memref<8x32xf32, #tpu.memory_space<vmem>> -> memref<1x32xf32, #tpu.memory_space<vmem>>
    %47 = tpu.memref_slice %arg10[%c5_i32_20] : memref<8x!tpu.dma_semaphore, #tpu.memory_space<semaphore_mem>> -> memref<1x!tpu.dma_semaphore, #tpu.memory_space<semaphore_mem>>
    %48 = tpu.memref_squeeze %47 : memref<1x!tpu.dma_semaphore, #tpu.memory_space<semaphore_mem>> -> memref<!tpu.dma_semaphore, #tpu.memory_space<semaphore_mem>>
    tpu.enqueue_dma source(%45 : memref<1x32xf32, #tpu.memory_space<any>>) target(%46 : memref<1x32xf32, #tpu.memory_space<vmem>>) target_semaphore(%48 : memref<!tpu.dma_semaphore, #tpu.memory_space<semaphore_mem>>)
    %c6_i32 = arith.constant 6 : i32
    %49 = arith.addi %0, %c6_i32 : i32
    %50 = arith.index_cast %arg0 : i32 to index
    %51 = arith.index_cast %49 : i32 to index
    %52 = memref.load %arg2[%50, %51] : memref<2x8xi32, #tpu.memory_space<smem>>
    %c6_i32_24 = arith.constant 6 : i32
    %c0_i32_25 = arith.constant 0 : i32
    %53 = tpu.memref_slice %arg3[%52, %c0_i32_25] : memref<64x32xf32, #tpu.memory_space<any>> -> memref<1x32xf32, #tpu.memory_space<any>>
    %c6_i32_26 = arith.constant 6 : i32
    %c0_i32_27 = arith.constant 0 : i32
    %54 = tpu.memref_slice %arg9[%c6_i32_26, %c0_i32_27] : memref<8x32xf32, #tpu.memory_space<vmem>> -> memref<1x32xf32, #tpu.memory_space<vmem>>
    %55 = tpu.memref_slice %arg10[%c6_i32_24] : memref<8x!tpu.dma_semaphore, #tpu.memory_space<semaphore_mem>> -> memref<1x!tpu.dma_semaphore, #tpu.memory_space<semaphore_mem>>
    %56 = tpu.memref_squeeze %55 : memref<1x!tpu.dma_semaphore, #tpu.memory_space<semaphore_mem>> -> memref<!tpu.dma_semaphore, #tpu.memory_space<semaphore_mem>>
    tpu.enqueue_dma source(%53 : memref<1x32xf32, #tpu.memory_space<any>>) target(%54 : memref<1x32xf32, #tpu.memory_space<vmem>>) target_semaphore(%56 : memref<!tpu.dma_semaphore, #tpu.memory_space<semaphore_mem>>)
    %c7_i32 = arith.constant 7 : i32
    %57 = arith.addi %0, %c7_i32 : i32
    %58 = arith.index_cast %arg0 : i32 to index
    %59 = arith.index_cast %57 : i32 to index
    %60 = memref.load %arg2[%58, %59] : memref<2x8xi32, #tpu.memory_space<smem>>
    %c7_i32_28 = arith.constant 7 : i32
    %c0_i32_29 = arith.constant 0 : i32
    %61 = tpu.memref_slice %arg3[%60, %c0_i32_29] : memref<64x32xf32, #tpu.memory_space<any>> -> memref<1x32xf32, #tpu.memory_space<any>>
    %c7_i32_30 = arith.constant 7 : i32
    %c0_i32_31 = arith.constant 0 : i32
    %62 = tpu.memref_slice %arg9[%c7_i32_30, %c0_i32_31] : memref<8x32xf32, #tpu.memory_space<vmem>> -> memref<1x32xf32, #tpu.memory_space<vmem>>
    %63 = tpu.memref_slice %arg10[%c7_i32_28] : memref<8x!tpu.dma_semaphore, #tpu.memory_space<semaphore_mem>> -> memref<1x!tpu.dma_semaphore, #tpu.memory_space<semaphore_mem>>
    %64 = tpu.memref_squeeze %63 : memref<1x!tpu.dma_semaphore, #tpu.memory_space<semaphore_mem>> -> memref<!tpu.dma_semaphore, #tpu.memory_space<semaphore_mem>>
    tpu.enqueue_dma source(%61 : memref<1x32xf32, #tpu.memory_space<any>>) target(%62 : memref<1x32xf32, #tpu.memory_space<vmem>>) target_semaphore(%64 : memref<!tpu.dma_semaphore, #tpu.memory_space<semaphore_mem>>)
    %c0_i32_32 = arith.constant 0 : i32
    %c0_i32_33 = arith.constant 0 : i32
    %c0_i32_34 = arith.constant 0 : i32
    %65 = tpu.memref_slice %arg3[%c0_i32_33, %c0_i32_34] : memref<64x32xf32, #tpu.memory_space<any>> -> memref<1x32xf32, #tpu.memory_space<any>>
    %c0_i32_35 = arith.constant 0 : i32
    %c0_i32_36 = arith.constant 0 : i32
    %66 = tpu.memref_slice %arg9[%c0_i32_35, %c0_i32_36] : memref<8x32xf32, #tpu.memory_space<vmem>> -> memref<1x32xf32, #tpu.memory_space<vmem>>
    %67 = tpu.memref_slice %arg10[%c0_i32_32] : memref<8x!tpu.dma_semaphore, #tpu.memory_space<semaphore_mem>> -> memref<1x!tpu.dma_semaphore, #tpu.memory_space<semaphore_mem>>
    %68 = tpu.memref_squeeze %67 : memref<1x!tpu.dma_semaphore, #tpu.memory_space<semaphore_mem>> -> memref<!tpu.dma_semaphore, #tpu.memory_space<semaphore_mem>>
    tpu.wait_dma2 semaphore(%68 : memref<!tpu.dma_semaphore, #tpu.memory_space<semaphore_mem>>) src(%65 : memref<1x32xf32, #tpu.memory_space<any>>) dst(%66 : memref<1x32xf32, #tpu.memory_space<vmem>>)
    %c1_i32_37 = arith.constant 1 : i32
    %c0_i32_38 = arith.constant 0 : i32
    %c0_i32_39 = arith.constant 0 : i32
    %69 = tpu.memref_slice %arg3[%c0_i32_38, %c0_i32_39] : memref<64x32xf32, #tpu.memory_space<any>> -> memref<1x32xf32, #tpu.memory_space<any>>
    %c1_i32_40 = arith.constant 1 : i32
    %c0_i32_41 = arith.constant 0 : i32
    %70 = tpu.memref_slice %arg9[%c1_i32_40, %c0_i32_41] : memref<8x32xf32, #tpu.memory_space<vmem>> -> memref<1x32xf32, #tpu.memory_space<vmem>>
    %71 = tpu.memref_slice %arg10[%c1_i32_37] : memref<8x!tpu.dma_semaphore, #tpu.memory_space<semaphore_mem>> -> memref<1x!tpu.dma_semaphore, #tpu.memory_space<semaphore_mem>>
    %72 = tpu.memref_squeeze %71 : memref<1x!tpu.dma_semaphore, #tpu.memory_space<semaphore_mem>> -> memref<!tpu.dma_semaphore, #tpu.memory_space<semaphore_mem>>
    tpu.wait_dma2 semaphore(%72 : memref<!tpu.dma_semaphore, #tpu.memory_space<semaphore_mem>>) src(%69 : memref<1x32xf32, #tpu.memory_space<any>>) dst(%70 : memref<1x32xf32, #tpu.memory_space<vmem>>)
    %c2_i32_42 = arith.constant 2 : i32
    %c0_i32_43 = arith.constant 0 : i32
    %c0_i32_44 = arith.constant 0 : i32
    %73 = tpu.memref_slice %arg3[%c0_i32_43, %c0_i32_44] : memref<64x32xf32, #tpu.memory_space<any>> -> memref<1x32xf32, #tpu.memory_space<any>>
    %c2_i32_45 = arith.constant 2 : i32
    %c0_i32_46 = arith.constant 0 : i32
    %74 = tpu.memref_slice %arg9[%c2_i32_45, %c0_i32_46] : memref<8x32xf32, #tpu.memory_space<vmem>> -> memref<1x32xf32, #tpu.memory_space<vmem>>
    %75 = tpu.memref_slice %arg10[%c2_i32_42] : memref<8x!tpu.dma_semaphore, #tpu.memory_space<semaphore_mem>> -> memref<1x!tpu.dma_semaphore, #tpu.memory_space<semaphore_mem>>
    %76 = tpu.memref_squeeze %75 : memref<1x!tpu.dma_semaphore, #tpu.memory_space<semaphore_mem>> -> memref<!tpu.dma_semaphore, #tpu.memory_space<semaphore_mem>>
    tpu.wait_dma2 semaphore(%76 : memref<!tpu.dma_semaphore, #tpu.memory_space<semaphore_mem>>) src(%73 : memref<1x32xf32, #tpu.memory_space<any>>) dst(%74 : memref<1x32xf32, #tpu.memory_space<vmem>>)
    %c3_i32_47 = arith.constant 3 : i32
    %c0_i32_48 = arith.constant 0 : i32
    %c0_i32_49 = arith.constant 0 : i32
    %77 = tpu.memref_slice %arg3[%c0_i32_48, %c0_i32_49] : memref<64x32xf32, #tpu.memory_space<any>> -> memref<1x32xf32, #tpu.memory_space<any>>
    %c3_i32_50 = arith.constant 3 : i32
    %c0_i32_51 = arith.constant 0 : i32
    %78 = tpu.memref_slice %arg9[%c3_i32_50, %c0_i32_51] : memref<8x32xf32, #tpu.memory_space<vmem>> -> memref<1x32xf32, #tpu.memory_space<vmem>>
    %79 = tpu.memref_slice %arg10[%c3_i32_47] : memref<8x!tpu.dma_semaphore, #tpu.memory_space<semaphore_mem>> -> memref<1x!tpu.dma_semaphore, #tpu.memory_space<semaphore_mem>>
    %80 = tpu.memref_squeeze %79 : memref<1x!tpu.dma_semaphore, #tpu.memory_space<semaphore_mem>> -> memref<!tpu.dma_semaphore, #tpu.memory_space<semaphore_mem>>
    tpu.wait_dma2 semaphore(%80 : memref<!tpu.dma_semaphore, #tpu.memory_space<semaphore_mem>>) src(%77 : memref<1x32xf32, #tpu.memory_space<any>>) dst(%78 : memref<1x32xf32, #tpu.memory_space<vmem>>)
    %c4_i32_52 = arith.constant 4 : i32
    %c0_i32_53 = arith.constant 0 : i32
    %c0_i32_54 = arith.constant 0 : i32
    %81 = tpu.memref_slice %arg3[%c0_i32_53, %c0_i32_54] : memref<64x32xf32, #tpu.memory_space<any>> -> memref<1x32xf32, #tpu.memory_space<any>>
    %c4_i32_55 = arith.constant 4 : i32
    %c0_i32_56 = arith.constant 0 : i32
    %82 = tpu.memref_slice %arg9[%c4_i32_55, %c0_i32_56] : memref<8x32xf32, #tpu.memory_space<vmem>> -> memref<1x32xf32, #tpu.memory_space<vmem>>
    %83 = tpu.memref_slice %arg10[%c4_i32_52] : memref<8x!tpu.dma_semaphore, #tpu.memory_space<semaphore_mem>> -> memref<1x!tpu.dma_semaphore, #tpu.memory_space<semaphore_mem>>
    %84 = tpu.memref_squeeze %83 : memref<1x!tpu.dma_semaphore, #tpu.memory_space<semaphore_mem>> -> memref<!tpu.dma_semaphore, #tpu.memory_space<semaphore_mem>>
    tpu.wait_dma2 semaphore(%84 : memref<!tpu.dma_semaphore, #tpu.memory_space<semaphore_mem>>) src(%81 : memref<1x32xf32, #tpu.memory_space<any>>) dst(%82 : memref<1x32xf32, #tpu.memory_space<vmem>>)
    %c5_i32_57 = arith.constant 5 : i32
    %c0_i32_58 = arith.constant 0 : i32
    %c0_i32_59 = arith.constant 0 : i32
    %85 = tpu.memref_slice %arg3[%c0_i32_58, %c0_i32_59] : memref<64x32xf32, #tpu.memory_space<any>> -> memref<1x32xf32, #tpu.memory_space<any>>
    %c5_i32_60 = arith.constant 5 : i32
    %c0_i32_61 = arith.constant 0 : i32
    %86 = tpu.memref_slice %arg9[%c5_i32_60, %c0_i32_61] : memref<8x32xf32, #tpu.memory_space<vmem>> -> memref<1x32xf32, #tpu.memory_space<vmem>>
    %87 = tpu.memref_slice %arg10[%c5_i32_57] : memref<8x!tpu.dma_semaphore, #tpu.memory_space<semaphore_mem>> -> memref<1x!tpu.dma_semaphore, #tpu.memory_space<semaphore_mem>>
    %88 = tpu.memref_squeeze %87 : memref<1x!tpu.dma_semaphore, #tpu.memory_space<semaphore_mem>> -> memref<!tpu.dma_semaphore, #tpu.memory_space<semaphore_mem>>
    tpu.wait_dma2 semaphore(%88 : memref<!tpu.dma_semaphore, #tpu.memory_space<semaphore_mem>>) src(%85 : memref<1x32xf32, #tpu.memory_space<any>>) dst(%86 : memref<1x32xf32, #tpu.memory_space<vmem>>)
    %c6_i32_62 = arith.constant 6 : i32
    %c0_i32_63 = arith.constant 0 : i32
    %c0_i32_64 = arith.constant 0 : i32
    %89 = tpu.memref_slice %arg3[%c0_i32_63, %c0_i32_64] : memref<64x32xf32, #tpu.memory_space<any>> -> memref<1x32xf32, #tpu.memory_space<any>>
    %c6_i32_65 = arith.constant 6 : i32
    %c0_i32_66 = arith.constant 0 : i32
    %90 = tpu.memref_slice %arg9[%c6_i32_65, %c0_i32_66] : memref<8x32xf32, #tpu.memory_space<vmem>> -> memref<1x32xf32, #tpu.memory_space<vmem>>
    %91 = tpu.memref_slice %arg10[%c6_i32_62] : memref<8x!tpu.dma_semaphore, #tpu.memory_space<semaphore_mem>> -> memref<1x!tpu.dma_semaphore, #tpu.memory_space<semaphore_mem>>
    %92 = tpu.memref_squeeze %91 : memref<1x!tpu.dma_semaphore, #tpu.memory_space<semaphore_mem>> -> memref<!tpu.dma_semaphore, #tpu.memory_space<semaphore_mem>>
    tpu.wait_dma2 semaphore(%92 : memref<!tpu.dma_semaphore, #tpu.memory_space<semaphore_mem>>) src(%89 : memref<1x32xf32, #tpu.memory_space<any>>) dst(%90 : memref<1x32xf32, #tpu.memory_space<vmem>>)
    %c7_i32_67 = arith.constant 7 : i32
    %c0_i32_68 = arith.constant 0 : i32
    %c0_i32_69 = arith.constant 0 : i32
    %93 = tpu.memref_slice %arg3[%c0_i32_68, %c0_i32_69] : memref<64x32xf32, #tpu.memory_space<any>> -> memref<1x32xf32, #tpu.memory_space<any>>
    %c7_i32_70 = arith.constant 7 : i32
    %c0_i32_71 = arith.constant 0 : i32
    %94 = tpu.memref_slice %arg9[%c7_i32_70, %c0_i32_71] : memref<8x32xf32, #tpu.memory_space<vmem>> -> memref<1x32xf32, #tpu.memory_space<vmem>>
    %95 = tpu.memref_slice %arg10[%c7_i32_67] : memref<8x!tpu.dma_semaphore, #tpu.memory_space<semaphore_mem>> -> memref<1x!tpu.dma_semaphore, #tpu.memory_space<semaphore_mem>>
    %96 = tpu.memref_squeeze %95 : memref<1x!tpu.dma_semaphore, #tpu.memory_space<semaphore_mem>> -> memref<!tpu.dma_semaphore, #tpu.memory_space<semaphore_mem>>
    tpu.wait_dma2 semaphore(%96 : memref<!tpu.dma_semaphore, #tpu.memory_space<semaphore_mem>>) src(%93 : memref<1x32xf32, #tpu.memory_space<any>>) dst(%94 : memref<1x32xf32, #tpu.memory_space<vmem>>)
    %c0 = arith.constant 0 : index
    %c0_72 = arith.constant 0 : index
    %97 = vector.load %arg9[%c0, %c0_72] : memref<8x32xf32, #tpu.memory_space<vmem>>, vector<8x32xf32>
    %c0_73 = arith.constant 0 : index
    %c0_74 = arith.constant 0 : index
    %98 = vector.load %arg4[%c0_73, %c0_74] : memref<32x32xf32, #tpu.memory_space<vmem>>, vector<32x32xf32>
    %cst = arith.constant dense<0.000000e+00> : vector<8x32xf32>
    %99 = tpu.matmul %97, %98, %cst {dimension_numbers = #tpu.dot_dimension_numbers<[1], [0], [0], [1], [0, 0, 1, 1], [], []>} : vector<8x32xf32>, vector<32x32xf32>, vector<8x32xf32> -> vector<8x32xf32>
    %c0_75 = arith.constant 0 : index
    %c0_76 = arith.constant 0 : index
    %100 = vector.load %arg5[%c0_75, %c0_76] : memref<1x32xf32, #tpu.memory_space<vmem>>, vector<1x32xf32>
    %101 = vector.broadcast %100 : vector<1x32xf32> to vector<8x32xf32>
    %102 = arith.addf %99, %101 : vector<8x32xf32>
    %103 = math.tanh %102 : vector<8x32xf32>
    %c0_77 = arith.constant 0 : index
    %c0_78 = arith.constant 0 : index
    %104 = vector.load %arg6[%c0_77, %c0_78] : memref<1x32xf32, #tpu.memory_space<vmem>>, vector<1x32xf32>
    %105 = vector.broadcast %104 : vector<1x32xf32> to vector<8x32xf32>
    %106 = arith.mulf %103, %105 : vector<8x32xf32>
    %cst_79 = arith.constant dense<0.000000e+00> : vector<8xf32>
    %107 = vector.multi_reduction <add>, %106, %cst_79 [1] : vector<8x32xf32> to vector<8xf32>
    %108 = vector.shape_cast %107 : vector<8xf32> to vector<8x1xf32>
    %c0_80 = arith.constant 0 : index
    %c0_81 = arith.constant 0 : index
    %109 = vector.load %arg7[%c0_80, %c0_81] : memref<1x1xf32, #tpu.memory_space<vmem>>, vector<1x1xf32>
    %110 = vector.broadcast %109 : vector<1x1xf32> to vector<8x1xf32>
    %111 = arith.addf %108, %110 : vector<8x1xf32>
    %c0_82 = arith.constant 0 : index
    %c0_83 = arith.constant 0 : index
    %c0_84 = arith.constant 0 : index
    %112 = vector.load %arg8[%c0_82, %c0_83, %c0_84] : memref<1x8x1xf32, #tpu.memory_space<vmem>>, vector<1x8x1xf32>
    %113 = vector.shape_cast %112 : vector<1x8x1xf32> to vector<8x1xf32>
    %114 = vector.shape_cast %111 : vector<8x1xf32> to vector<1x8x1xf32>
    tpu.vector_store %arg8[%c0_82, %c0_83, %c0_84], %114 {strides = array<i32>} : memref<1x8x1xf32, #tpu.memory_space<vmem>>, vector<1x8x1xf32>,
    return
  }
  func.func @transform_1(%arg0: i32, %arg1: i32, %arg2: memref<2x8xi32, #tpu.memory_space<smem>>) -> (i32, i32) {
    %c0_i32 = arith.constant 0 : i32
    %c0_i32_0 = arith.constant 0 : i32
    %c0_i32_1 = arith.constant 0 : i32
    return %c0_i32, %c0_i32_0 : i32, i32
  }
  func.func @transform_2(%arg0: i32, %arg1: i32, %arg2: memref<2x8xi32, #tpu.memory_space<smem>>) -> (i32, i32) {
    %c0_i32 = arith.constant 0 : i32
    %c0_i32_0 = arith.constant 0 : i32
    %c0_i32_1 = arith.constant 0 : i32
    return %c0_i32, %c0_i32_0 : i32, i32
  }
  func.func @transform_3(%arg0: i32, %arg1: i32, %arg2: memref<2x8xi32, #tpu.memory_space<smem>>) -> (i32, i32) {
    %c0_i32 = arith.constant 0 : i32
    %c0_i32_0 = arith.constant 0 : i32
    %c0_i32_1 = arith.constant 0 : i32
    return %c0_i32, %c0_i32_0 : i32, i32
  }
  func.func @transform_4(%arg0: i32, %arg1: i32, %arg2: memref<2x8xi32, #tpu.memory_space<smem>>) -> (i32, i32) {
    %c0_i32 = arith.constant 0 : i32
    %c0_i32_0 = arith.constant 0 : i32
    %c0_i32_1 = arith.constant 0 : i32
    return %c0_i32, %c0_i32_0 : i32, i32
  }
  func.func @transform_5(%arg0: i32, %arg1: i32, %arg2: memref<2x8xi32, #tpu.memory_space<smem>>) -> (i32, i32, i32) {
    %c0_i32 = arith.constant 0 : i32
    %c0_i32_0 = arith.constant 0 : i32
    return %arg0, %arg1, %c0_i32 : i32, i32, i32
  }
}

</mosaic_0001>

<llo_original>
// kernel: tpu_custom_call.1
$region0: #{tpu_custom_call.1}
  #allocation0 [shape = 'u32[]', space=smem, size = 0x4, offset = 0x4, fixed_abs, tag = 'smem constant byte address 0x4 - core index']
  #allocation1 [shape = 'u32[144,128]{1,0:T(1,128)}', space=vmem, size = 0x12000, scoped, tag = 'internal scratch']
  #allocation2 [shape = 'f32[8,32]{1,0:T(8,128)}', space=vmem, size = 0x1000, scoped, tag = 'scratch operand']
  #allocation3 [shape = 's32[8]{0}', space=sflag, size = 0x20, scoped, tag = 'scratch operand']
  #allocation4 [shape = 's32[1]{0}', space=sflag, size = 0x4, scoped, tag = 'scoped memory for tpu_custom_call.1']
  #allocation5 [shape = 'u8[1024]{0}', space=smem, size = 0x400, scoped, tag = 'prefetched SMEM operand 0']
  #allocation6 [shape = 'f32[1,1]{1,0:T(1,128)S(1)}', space=vmem, size = 0x200, scoped, tag = 'scoped memory for tpu_custom_call.1']
  #allocation7 [shape = 's32[]', space=sflag, size = 0x4, offset = 0, fixed_abs, tag = 'sflag constant byte address 0x0 - dummy sync flag']
  #allocation8 [shape = 's32[]', space=sflag, size = 0x4, offset = 0, fixed_abs, tag = 'sflag constant byte address 0x0 - dummy sync flag']
  #allocation9 [shape = 's32[]', space=sflag, size = 0x4, offset = 0, fixed_abs, tag = 'sflag constant byte address 0x0 - dummy sync flag']
  #allocation10 [shape = 's32[]', space=sflag, size = 0x4, offset = 0, fixed_abs, tag = 'sflag constant byte address 0x0 - dummy sync flag']
  #allocation11 [shape = 's32[]', space=sflag, size = 0x4, offset = 0, fixed_abs, tag = 'sflag constant byte address 0x0 - dummy sync flag']
  #allocation12 [shape = 's32[]', space=sflag, size = 0x4, offset = 0, fixed_abs, tag = 'sflag constant byte address 0x0 - dummy sync flag']
  #allocation13 [shape = 's32[]', space=sflag, size = 0x4, offset = 0, fixed_abs, tag = 'sflag constant byte address 0x0 - dummy sync flag']
  #allocation14 [shape = 's32[]', space=sflag, size = 0x4, offset = 0, fixed_abs, tag = 'sflag constant byte address 0x0 - dummy sync flag']
  %s0 = inlined_call_operand.vmem [shape: s32[2,8], index: 0, kind: input, shape index: {}]
  %s1 = inlined_call_operand.vmem [shape: f32[64,32], index: 1, kind: input, shape index: {}]
  %s2 = inlined_call_operand.vmem [shape: f32[32,32], index: 2, kind: input, shape index: {}]
  %s3 = inlined_call_operand.vmem [shape: f32[1,32], index: 3, kind: input, shape index: {}]
  %s4 = inlined_call_operand.vmem [shape: f32[1,32], index: 4, kind: input, shape index: {}]
  %s5 = inlined_call_operand.<no memory space> [shape: f32[1,1], index: 5, kind: input, shape index: {}]
  %s6 = inlined_call_operand.vmem [shape: f32[2,8,1], index: 6, kind: output, shape index: {}]
  %s7 = sld [smem:[#allocation0]]
  $region289: #{tpu_custom_call.1} parent=0
    _
  %s9 = ssub.s32 1, %s7
  %s10 = scalar_select 0, %s9, %s7
  %s11 = sshll.u32 %s0, 4
  %s12 = int_to_ptr.vmem [resolvable:$true] %s11
  %14 = dma.vmem_to_smem %s12, 32, [#allocation5], [#allocation4]
  %v15 = vstv %s5
  %16 = vst [vmem:[#allocation6] sm:$0x1] %v15
  %17 = dma.done [#allocation4], 32
  %18 = sfence
  loop: start=0, step=1, limit=4
  $region2: #{tpu_custom_call.1} parent=0 // loop_pre_header
    _
  $region3: #{tpu_custom_call.1} parent=0 // loop_header
    %s20 = sphi 0, %s24
    %p21 = scmp.ge.s32.totalorder %s20, 4
    %s27 = sphi 0, %s39
    %s28 = sphi 0, %s35
    %s29 = sphi 0, %s27
    %s30 = sphi 0, %s28
    %s31 = sphi 0, %s29
    %s32 = sphi 0, %s30
    %s40 = sphi 0, %s40
    %s42 = sphi 0, %s40
    %s43 = sphi 0, %s42
    %s57 = sphi 0, %s43
    %s61 = sphi 0, %s61
    %s63 = sphi 0, %s61
    %s64 = sphi 0, %s63
    %s78 = sphi 0, %s64
    %s82 = sphi 0, %s82
    %s84 = sphi 0, %s82
    %s85 = sphi 0, %s84
    %s99 = sphi 0, %s85
    %s103 = sphi 0, %s103
    %s105 = sphi 0, %s103
    %s106 = sphi 0, %s105
    %s120 = sphi 0, %s106
    %s128 = sphi 0, %s130
    %s131 = sphi 0, %s128
    %s132 = sphi 0, %s131
    %s148 = sphi 0, %s132
  $region4: #{tpu_custom_call.1} parent=0 // loop_header_branch
    %23 = sbr.rel (%p21) target = $region8
  $region5: #{tpu_custom_call.1} parent=0 // loop_body
    %s25 = ssub.s32 %s20, 1
    %s26 = ssub.s32 %s20, 2
    %s33 = sadd.s32 1, %s28
    %p34 = scmp.ge.s32.totalorder %s33, 1
    %s35 = scalar_select %p34, 0, %s33
    %s36 = sadd.s32 1, %s27
    %s37 = scalar_select %p34, %s36, %s27
    %p38 = scmp.ge.s32.totalorder %s37, 2
    %s39 = scalar_select %p38, 0, %s37
    %s41 = sadd.s32 %s40, 1
    %p44 = scmp.eq.s32.totalorder %s20, 1
    %p45 = scmp.ne.s32.totalorder %s40, %s42
    %p46 = scmp.eq.s32.totalorder %s20, 0
    %p47 = por %p45, %p46
    %p48 = scmp.ne.s32.totalorder %s40, %s42
    %p49 = scmp.eq.s32.totalorder %s25, 1
    %p50 = por %p48, %p49
    %p51 = scmp.ne.s32.totalorder %s42, %s43
    %p52 = scmp.eq.s32.totalorder %s25, 0
    %p53 = por %p51, %p52
    %p54 = scmp.ne.s32.totalorder %s42, %s43
    %p55 = scmp.eq.s32.totalorder %s26, 1
    %p56 = por %p54, %p55
    %p58 = scmp.ne.s32.totalorder %s43, %s57
    %p59 = scmp.eq.s32.totalorder %s26, 0
    %p60 = por %p58, %p59
    %s62 = sadd.s32 %s61, 1
    %p65 = scmp.eq.s32.totalorder %s20, 1
    %p66 = scmp.ne.s32.totalorder %s61, %s63
    %p67 = scmp.eq.s32.totalorder %s20, 0
    %p68 = por %p66, %p67
    %p69 = scmp.ne.s32.totalorder %s61, %s63
    %p70 = scmp.eq.s32.totalorder %s25, 1
    %p71 = por %p69, %p70
    %p72 = scmp.ne.s32.totalorder %s63, %s64
    %p73 = scmp.eq.s32.totalorder %s25, 0
    %p74 = por %p72, %p73
    %p75 = scmp.ne.s32.totalorder %s63, %s64
    %p76 = scmp.eq.s32.totalorder %s26, 1
    %p77 = por %p75, %p76
    %p79 = scmp.ne.s32.totalorder %s64, %s78
    %p80 = scmp.eq.s32.totalorder %s26, 0
    %p81 = por %p79, %p80
    %s83 = sadd.s32 %s82, 1
    %p86 = scmp.eq.s32.totalorder %s20, 1
    %p87 = scmp.ne.s32.totalorder %s82, %s84
    %p88 = scmp.eq.s32.totalorder %s20, 0
    %p89 = por %p87, %p88
    %p90 = scmp.ne.s32.totalorder %s82, %s84
    %p91 = scmp.eq.s32.totalorder %s25, 1
    %p92 = por %p90, %p91
    %p93 = scmp.ne.s32.totalorder %s84, %s85
    %p94 = scmp.eq.s32.totalorder %s25, 0
    %p95 = por %p93, %p94
    %p96 = scmp.ne.s32.totalorder %s84, %s85
    %p97 = scmp.eq.s32.totalorder %s26, 1
    %p98 = por %p96, %p97
    %p100 = scmp.ne.s32.totalorder %s85, %s99
    %p101 = scmp.eq.s32.totalorder %s26, 0
    %p102 = por %p100, %p101
    %s104 = sadd.s32 %s103, 1
    %p107 = scmp.eq.s32.totalorder %s20, 1
    %p108 = scmp.ne.s32.totalorder %s103, %s105
    %p109 = scmp.eq.s32.totalorder %s20, 0
    %p110 = por %p108, %p109
    %p111 = scmp.ne.s32.totalorder %s103, %s105
    %p112 = scmp.eq.s32.totalorder %s25, 1
    %p113 = por %p111, %p112
    %p114 = scmp.ne.s32.totalorder %s105, %s106
    %p115 = scmp.eq.s32.totalorder %s25, 0
    %p116 = por %p114, %p115
    %p117 = scmp.ne.s32.totalorder %s105, %s106
    %p118 = scmp.eq.s32.totalorder %s26, 1
    %p119 = por %p117, %p118
    %p121 = scmp.ne.s32.totalorder %s106, %s120
    %p122 = scmp.eq.s32.totalorder %s26, 0
    %p123 = por %p121, %p122
    %s124 = ssub.s32 %s27, %s39
    %s125 = ssub.s32 %s28, %s35
    %s126 = sor.u32 %s124, %s125
    %p127 = scmp.eq.s32.totalorder %s126, 0
    %s129 = sadd.s32 %s128, 1
    %s130 = scalar_select %p127, %s128, %s129
    %p133 = pneg %p127
    %p134 = scmp.eq.s32.totalorder %s20, 1
    %p135 = por %p133, %p134
    %p136 = scmp.ne.s32.totalorder %s128, %s131
    %p137 = scmp.eq.s32.totalorder %s20, 0
    %p138 = por %p136, %p137
    %p139 = scmp.ne.s32.totalorder %s128, %s131
    %p140 = scmp.eq.s32.totalorder %s25, 1
    %p141 = por %p139, %p140
    %p142 = scmp.ne.s32.totalorder %s131, %s132
    %p143 = scmp.eq.s32.totalorder %s25, 0
    %p144 = por %p142, %p143
    %p145 = scmp.ne.s32.totalorder %s131, %s132
    %p146 = scmp.eq.s32.totalorder %s26, 1
    %p147 = por %p145, %p146
    %p149 = scmp.ne.s32.totalorder %s132, %s148
    %p150 = scmp.eq.s32.totalorder %s26, 0
    %p151 = por %p149, %p150
    %p152 = scmp.le.s32.totalorder 1, %s20
    %p153 = scmp.lt.s32.totalorder %s20, 3
    %p154 = pnand %p152, %p153
    %p155 = pneg %p154
    // Predicated region
    $region9: #{tpu_custom_call.1} parent=5 // pred_check
      _
    $region10: #{tpu_custom_call.1} parent=5 // pred_check_branch
      %157 = sbr.rel (%p154) target = $region12
    $region11: #{tpu_custom_call.1} parent=5 // pred_region
      %s158 = ssub.s32 %s20, 1
      // Predicated region
      $region13: #{tpu_custom_call.1} parent=11 // pred_check
        %p159 = pneg %p53
      $region14: #{tpu_custom_call.1} parent=11 // pred_check_branch
        %161 = sbr.rel (%p159) target = $region16
      $region15: #{tpu_custom_call.1} parent=11 // pred_region
        _
      $region16: #{tpu_custom_call.1} parent=11 // pred_fallthru
        _
      // Predicated region
      $region17: #{tpu_custom_call.1} parent=11 // pred_check
        %p162 = pneg %p74
      $region18: #{tpu_custom_call.1} parent=11 // pred_check_branch
        %164 = sbr.rel (%p162) target = $region20
      $region19: #{tpu_custom_call.1} parent=11 // pred_region
        _
      $region20: #{tpu_custom_call.1} parent=11 // pred_fallthru
        _
      // Predicated region
      $region21: #{tpu_custom_call.1} parent=11 // pred_check
        %p165 = pneg %p95
      $region22: #{tpu_custom_call.1} parent=11 // pred_check_branch
        %167 = sbr.rel (%p165) target = $region24
      $region23: #{tpu_custom_call.1} parent=11 // pred_region
        _
      $region24: #{tpu_custom_call.1} parent=11 // pred_fallthru
        _
      // Predicated region
      $region25: #{tpu_custom_call.1} parent=11 // pred_check
        %p168 = pneg %p116
      $region26: #{tpu_custom_call.1} parent=11 // pred_check_branch
        %170 = sbr.rel (%p168) target = $region28
      $region27: #{tpu_custom_call.1} parent=11 // pred_region
        _
      $region28: #{tpu_custom_call.1} parent=11 // pred_fallthru
        _
    $region12: #{tpu_custom_call.1} parent=5 // pred_fallthru
      _
    %p171 = scmp.lt.s32.totalorder %s20, 2
    // Predicated region
    $region29: #{tpu_custom_call.1} parent=5 // pred_check
      %p172 = pneg %p171
    $region30: #{tpu_custom_call.1} parent=5 // pred_check_branch
      %174 = sbr.rel (%p172) target = $region32
    $region31: #{tpu_custom_call.1} parent=5 // pred_region
      _
    $region32: #{tpu_custom_call.1} parent=5 // pred_fallthru
      _
    %p175 = scmp.le.s32.totalorder 1, %s20
    %p176 = scmp.lt.s32.totalorder %s20, 3
    %p177 = pnand %p175, %p176
    %p178 = pneg %p177
    // Predicated region
    $region33: #{tpu_custom_call.1} parent=5 // pred_check
      _
    $region34: #{tpu_custom_call.1} parent=5 // pred_check_branch
      %180 = sbr.rel (%p177) target = $region36
    $region35: #{tpu_custom_call.1} parent=5 // pred_region
      %s181 = ssub.s32 %s20, 1
      %p182 = pneg %p53
      %p183 = pneg %p50
      %p184 = pneg %p74
      %p185 = pneg %p71
      %p186 = pneg %p95
      %p187 = pneg %p92
      %p188 = pneg %p116
      %p189 = pneg %p113
      %p190 = pneg %p144
      %p191 = pneg %p141
      %p192 = scmp.lt.s32.totalorder %s29, 1
      %s193 = scalar_select %p192, %s29, 1
      %p194 = scmp.lt.s32.totalorder %s30, 0
      %s195 = scalar_select %p194, %s30, 0
      %s196 = sadd.s32 %s195, %s193
      %s197 = smul.addr %s196, 8
      %s198 = scalar_lea.vmem %s6, %s197
      %p199 = scmp.lt.s32.totalorder %s29, 1
      %s200 = scalar_select %p199, %s29, 1
      %p201 = scmp.lt.s32.totalorder %s30, 0
      %s202 = scalar_select %p201, %s30, 0
      %s203 = sadd.s32 %s202, %s200
      %s204 = smul.addr %s203, 8
      %s205 = scalar_lea.vmem %s6, %s204
      %s206 = smul.u32 %s30, 8
      %s207 = sshra.s32 %s206, 7
      %s208 = sand.u32 %s206, 127
      %s209 = sadd.s32 %s207, %s29
      %s210 = smul.u32 %s209, 128
      %s211 = sshra.s32 %s206, 7
      %s212 = sand.u32 %s206, 127
      %s213 = sadd.s32 %s210, %s212
      %s214 = sld [smem:[#allocation5 + %s213]]
      %s215 = scalar_lea.vmem %s1, %s214
      %p217 = scmp.lt.u32.totalorder 1, 8
      %p218 = pneg %p217
      // Predicated region
      $region37: #{tpu_custom_call.1} parent=35 // pred_check
        _
      $region38: #{tpu_custom_call.1} parent=35 // pred_check_branch
        %220 = sbr.rel (%p217) target = $region40
      $region39: #{tpu_custom_call.1} parent=35 // pred_region
        %s235 = sand.u32 1, 7
        %p236 = scmp.eq.s32.totalorder %s235, 0
        %p237 = pneg %p236
        // Predicated region
        $region52: #{tpu_custom_call.1} parent=39 // pred_check
          _
        $region53: #{tpu_custom_call.1} parent=39 // pred_check_branch
          %239 = sbr.rel (%p236) target = $region55
        $region54: #{tpu_custom_call.1} parent=39 // pred_region
          %s240 = sand.u32 1, 7
          %s241 = ssub.s32 1, %s240
          %s242 = scalar_lea.vmem %s215, %s241
          %s243 = ssub.s32 1, %s240
          %s244 = scalar_lea.vmem [#allocation2], %s243
          %s245 = sshllo.u32 0, %s240
          loop: start=0, step=1, limit=1
          $region56: #{tpu_custom_call.1} parent=54 // loop_pre_header
            _
          $region57: #{tpu_custom_call.1} parent=54 // loop_header
            %s247 = sphi 0, %s251
            %p248 = scmp.ge.s32.totalorder %s247, 1
            %s252 = sphi %s242, %s242
            %s253 = sphi %s244, %s244
          $region58: #{tpu_custom_call.1} parent=54 // loop_header_branch
            %250 = sbr.rel (%p248) target = $region62
          $region59: #{tpu_custom_call.1} parent=54 // loop_body
            %v254 = vld [vmem:[%s252] sm:%s245]
            %255 = vst [vmem:[%s253] sm:%s245] %v254
          $region60: #{tpu_custom_call.1} parent=54 // loop_footer
            %s251 = sadd.s32 1, %s247
          $region61: #{tpu_custom_call.1} parent=54 // loop_footer_branch
            %246 = sbr.rel target = $region57
          $region62: #{tpu_custom_call.1} parent=54 // loop_exit
            _
        $region55: #{tpu_custom_call.1} parent=39 // pred_fallthru
          _
      $region40: #{tpu_custom_call.1} parent=35 // pred_fallthru
        _
      // Predicated region
      $region41: #{tpu_custom_call.1} parent=35 // pred_check
        %p221 = pneg %p217
      $region42: #{tpu_custom_call.1} parent=35 // pred_check_branch
        %223 = sbr.rel (%p221) target = $region44
      $region43: #{tpu_custom_call.1} parent=35 // pred_region
        %s224 = sshllo.u32 0, 1
        loop: start=0, step=1, limit=1
        $region45: #{tpu_custom_call.1} parent=43 // loop_pre_header
          _
        $region46: #{tpu_custom_call.1} parent=43 // loop_header
          %s226 = sphi 0, %s230
          %p227 = scmp.ge.s32.totalorder %s226, 1
          %s231 = sphi %s215, %s215
          %s232 = sphi [#allocation2], [#allocation2]
        $region47: #{tpu_custom_call.1} parent=43 // loop_header_branch
          %229 = sbr.rel (%p227) target = $region51
        $region48: #{tpu_custom_call.1} parent=43 // loop_body
          %v233 = vld [vmem:[%s231] sm:%s224]
          %234 = vst [vmem:[%s232] sm:%s224] %v233
        $region49: #{tpu_custom_call.1} parent=43 // loop_footer
          %s230 = sadd.s32 1, %s226
        $region50: #{tpu_custom_call.1} parent=43 // loop_footer_branch
          %225 = sbr.rel target = $region46
        $region51: #{tpu_custom_call.1} parent=43 // loop_exit
          _
      $region44: #{tpu_custom_call.1} parent=35 // pred_fallthru
        _
      // Predicated region
      $region63: #{tpu_custom_call.1} parent=35 // pred_check
        _
      $region64: #{tpu_custom_call.1} parent=35 // pred_check_branch
        %258 = sbr.rel (0) target = $region66
      $region65: #{tpu_custom_call.1} parent=35 // pred_region
        %259 = vsyncadd [#allocation3], 16
      $region66: #{tpu_custom_call.1} parent=35 // pred_fallthru
        _
      %s260 = sadd.s32 %s206, 1
      %s261 = sshra.s32 %s260, 7
      %s262 = sand.u32 %s260, 127
      %s263 = sadd.s32 %s261, %s29
      %s264 = smul.u32 %s263, 128
      %s265 = sshra.s32 %s260, 7
      %s266 = sand.u32 %s260, 127
      %s267 = sadd.s32 %s264, %s266
      %s268 = sld [smem:[#allocation5 + %s267]]
      %s269 = scalar_lea.vmem %s1, %s268
      %s270 = scalar_lea.vmem [#allocation2], 1
      %s271 = scalar_lea.sflag [#allocation3], 1
      %p273 = scmp.lt.u32.totalorder 1, 8
      %p274 = pneg %p273
      // Predicated region
      $region67: #{tpu_custom_call.1} parent=35 // pred_check
        _
      $region68: #{tpu_custom_call.1} parent=35 // pred_check_branch
        %276 = sbr.rel (%p273) target = $region70
      $region69: #{tpu_custom_call.1} parent=35 // pred_region
        %s291 = sand.u32 1, 7
        %p292 = scmp.eq.s32.totalorder %s291, 0
        %p293 = pneg %p292
        // Predicated region
        $region82: #{tpu_custom_call.1} parent=69 // pred_check
          _
        $region83: #{tpu_custom_call.1} parent=69 // pred_check_branch
          %295 = sbr.rel (%p292) target = $region85
        $region84: #{tpu_custom_call.1} parent=69 // pred_region
          %s296 = sand.u32 1, 7
          %s297 = ssub.s32 1, %s296
          %s298 = scalar_lea.vmem %s269, %s297
          %s299 = ssub.s32 1, %s296
          %s300 = scalar_lea.vmem %s270, %s299 [#allocation2]
          %s301 = sshllo.u32 0, %s296
          loop: start=0, step=1, limit=1
          $region86: #{tpu_custom_call.1} parent=84 // loop_pre_header
            _
          $region87: #{tpu_custom_call.1} parent=84 // loop_header
            %s303 = sphi 0, %s307
            %p304 = scmp.ge.s32.totalorder %s303, 1
            %s308 = sphi %s298, %s298
            %s309 = sphi %s300, %s300
          $region88: #{tpu_custom_call.1} parent=84 // loop_header_branch
            %306 = sbr.rel (%p304) target = $region92
          $region89: #{tpu_custom_call.1} parent=84 // loop_body
            %v310 = vld [vmem:[%s308] sm:%s301]
            %311 = vst [vmem:[%s309] sm:%s301] %v310
          $region90: #{tpu_custom_call.1} parent=84 // loop_footer
            %s307 = sadd.s32 1, %s303
          $region91: #{tpu_custom_call.1} parent=84 // loop_footer_branch
            %302 = sbr.rel target = $region87
          $region92: #{tpu_custom_call.1} parent=84 // loop_exit
            _
        $region85: #{tpu_custom_call.1} parent=69 // pred_fallthru
          _
      $region70: #{tpu_custom_call.1} parent=35 // pred_fallthru
        _
      // Predicated region
      $region71: #{tpu_custom_call.1} parent=35 // pred_check
        %p277 = pneg %p273
      $region72: #{tpu_custom_call.1} parent=35 // pred_check_branch
        %279 = sbr.rel (%p277) target = $region74
      $region73: #{tpu_custom_call.1} parent=35 // pred_region
        %s280 = sshllo.u32 0, 1
        loop: start=0, step=1, limit=1
        $region75: #{tpu_custom_call.1} parent=73 // loop_pre_header
          _
        $region76: #{tpu_custom_call.1} parent=73 // loop_header
          %s282 = sphi 0, %s286
          %p283 = scmp.ge.s32.totalorder %s282, 1
          %s287 = sphi %s269, %s269
          %s288 = sphi %s270, %s270
        $region77: #{tpu_custom_call.1} parent=73 // loop_header_branch
          %285 = sbr.rel (%p283) target = $region81
        $region78: #{tpu_custom_call.1} parent=73 // loop_body
          %v289 = vld [vmem:[%s287] sm:%s280]
          %290 = vst [vmem:[%s288] sm:%s280] %v289
        $region79: #{tpu_custom_call.1} parent=73 // loop_footer
          %s286 = sadd.s32 1, %s282
        $region80: #{tpu_custom_call.1} parent=73 // loop_footer_branch
          %281 = sbr.rel target = $region76
        $region81: #{tpu_custom_call.1} parent=73 // loop_exit
          _
      $region74: #{tpu_custom_call.1} parent=35 // pred_fallthru
        _
      // Predicated region
      $region93: #{tpu_custom_call.1} parent=35 // pred_check
        _
      $region94: #{tpu_custom_call.1} parent=35 // pred_check_branch
        %314 = sbr.rel (0) target = $region96
      $region95: #{tpu_custom_call.1} parent=35 // pred_region
        %315 = vsyncadd %s271, 16
      $region96: #{tpu_custom_call.1} parent=35 // pred_fallthru
        _
      %s316 = sadd.s32 %s206, 2
      %s317 = sshra.s32 %s316, 7
      %s318 = sand.u32 %s316, 127
      %s319 = sadd.s32 %s317, %s29
      %s320 = smul.u32 %s319, 128
      %s321 = sshra.s32 %s316, 7
      %s322 = sand.u32 %s316, 127
      %s323 = sadd.s32 %s320, %s322
      %s324 = sld [smem:[#allocation5 + %s323]]
      %s325 = scalar_lea.vmem %s1, %s324
      %s326 = scalar_lea.vmem [#allocation2], 2
      %s327 = scalar_lea.sflag [#allocation3], 2
      %p329 = scmp.lt.u32.totalorder 1, 8
      %p330 = pneg %p329
      // Predicated region
      $region97: #{tpu_custom_call.1} parent=35 // pred_check
        _
      $region98: #{tpu_custom_call.1} parent=35 // pred_check_branch
        %332 = sbr.rel (%p329) target = $region100
      $region99: #{tpu_custom_call.1} parent=35 // pred_region
        %s347 = sand.u32 1, 7
        %p348 = scmp.eq.s32.totalorder %s347, 0
        %p349 = pneg %p348
        // Predicated region
        $region112: #{tpu_custom_call.1} parent=99 // pred_check
          _
        $region113: #{tpu_custom_call.1} parent=99 // pred_check_branch
          %351 = sbr.rel (%p348) target = $region115
        $region114: #{tpu_custom_call.1} parent=99 // pred_region
          %s352 = sand.u32 1, 7
          %s353 = ssub.s32 1, %s352
          %s354 = scalar_lea.vmem %s325, %s353
          %s355 = ssub.s32 1, %s352
          %s356 = scalar_lea.vmem %s326, %s355 [#allocation2]
          %s357 = sshllo.u32 0, %s352
          loop: start=0, step=1, limit=1
          $region116: #{tpu_custom_call.1} parent=114 // loop_pre_header
            _
          $region117: #{tpu_custom_call.1} parent=114 // loop_header
            %s359 = sphi 0, %s363
            %p360 = scmp.ge.s32.totalorder %s359, 1
            %s364 = sphi %s354, %s354
            %s365 = sphi %s356, %s356
          $region118: #{tpu_custom_call.1} parent=114 // loop_header_branch
            %362 = sbr.rel (%p360) target = $region122
          $region119: #{tpu_custom_call.1} parent=114 // loop_body
            %v366 = vld [vmem:[%s364] sm:%s357]
            %367 = vst [vmem:[%s365] sm:%s357] %v366
          $region120: #{tpu_custom_call.1} parent=114 // loop_footer
            %s363 = sadd.s32 1, %s359
          $region121: #{tpu_custom_call.1} parent=114 // loop_footer_branch
            %358 = sbr.rel target = $region117
          $region122: #{tpu_custom_call.1} parent=114 // loop_exit
            _
        $region115: #{tpu_custom_call.1} parent=99 // pred_fallthru
          _
      $region100: #{tpu_custom_call.1} parent=35 // pred_fallthru
        _
      // Predicated region
      $region101: #{tpu_custom_call.1} parent=35 // pred_check
        %p333 = pneg %p329
      $region102: #{tpu_custom_call.1} parent=35 // pred_check_branch
        %335 = sbr.rel (%p333) target = $region104
      $region103: #{tpu_custom_call.1} parent=35 // pred_region
        %s336 = sshllo.u32 0, 1
        loop: start=0, step=1, limit=1
        $region105: #{tpu_custom_call.1} parent=103 // loop_pre_header
          _
        $region106: #{tpu_custom_call.1} parent=103 // loop_header
          %s338 = sphi 0, %s342
          %p339 = scmp.ge.s32.totalorder %s338, 1
          %s343 = sphi %s325, %s325
          %s344 = sphi %s326, %s326
        $region107: #{tpu_custom_call.1} parent=103 // loop_header_branch
          %341 = sbr.rel (%p339) target = $region111
        $region108: #{tpu_custom_call.1} parent=103 // loop_body
          %v345 = vld [vmem:[%s343] sm:%s336]
          %346 = vst [vmem:[%s344] sm:%s336] %v345
        $region109: #{tpu_custom_call.1} parent=103 // loop_footer
          %s342 = sadd.s32 1, %s338
        $region110: #{tpu_custom_call.1} parent=103 // loop_footer_branch
          %337 = sbr.rel target = $region106
        $region111: #{tpu_custom_call.1} parent=103 // loop_exit
          _
      $region104: #{tpu_custom_call.1} parent=35 // pred_fallthru
        _
      // Predicated region
      $region123: #{tpu_custom_call.1} parent=35 // pred_check
        _
      $region124: #{tpu_custom_call.1} parent=35 // pred_check_branch
        %370 = sbr.rel (0) target = $region126
      $region125: #{tpu_custom_call.1} parent=35 // pred_region
        %371 = vsyncadd %s327, 16
      $region126: #{tpu_custom_call.1} parent=35 // pred_fallthru
        _
      %s372 = sadd.s32 %s206, 3
      %s373 = sshra.s32 %s372, 7
      %s374 = sand.u32 %s372, 127
      %s375 = sadd.s32 %s373, %s29
      %s376 = smul.u32 %s375, 128
      %s377 = sshra.s32 %s372, 7
      %s378 = sand.u32 %s372, 127
      %s379 = sadd.s32 %s376, %s378
      %s380 = sld [smem:[#allocation5 + %s379]]
      %s381 = scalar_lea.vmem %s1, %s380
      %s382 = scalar_lea.vmem [#allocation2], 3
      %s383 = scalar_lea.sflag [#allocation3], 3
      %p385 = scmp.lt.u32.totalorder 1, 8
      %p386 = pneg %p385
      // Predicated region
      $region127: #{tpu_custom_call.1} parent=35 // pred_check
        _
      $region128: #{tpu_custom_call.1} parent=35 // pred_check_branch
        %388 = sbr.rel (%p385) target = $region130
      $region129: #{tpu_custom_call.1} parent=35 // pred_region
        %s403 = sand.u32 1, 7
        %p404 = scmp.eq.s32.totalorder %s403, 0
        %p405 = pneg %p404
        // Predicated region
        $region142: #{tpu_custom_call.1} parent=129 // pred_check
          _
        $region143: #{tpu_custom_call.1} parent=129 // pred_check_branch
          %407 = sbr.rel (%p404) target = $region145
        $region144: #{tpu_custom_call.1} parent=129 // pred_region
          %s408 = sand.u32 1, 7
          %s409 = ssub.s32 1, %s408
          %s410 = scalar_lea.vmem %s381, %s409
          %s411 = ssub.s32 1, %s408
          %s412 = scalar_lea.vmem %s382, %s411 [#allocation2]
          %s413 = sshllo.u32 0, %s408
          loop: start=0, step=1, limit=1
          $region146: #{tpu_custom_call.1} parent=144 // loop_pre_header
            _
          $region147: #{tpu_custom_call.1} parent=144 // loop_header
            %s415 = sphi 0, %s419
            %p416 = scmp.ge.s32.totalorder %s415, 1
            %s420 = sphi %s410, %s410
            %s421 = sphi %s412, %s412
          $region148: #{tpu_custom_call.1} parent=144 // loop_header_branch
            %418 = sbr.rel (%p416) target = $region152
          $region149: #{tpu_custom_call.1} parent=144 // loop_body
            %v422 = vld [vmem:[%s420] sm:%s413]
            %423 = vst [vmem:[%s421] sm:%s413] %v422
          $region150: #{tpu_custom_call.1} parent=144 // loop_footer
            %s419 = sadd.s32 1, %s415
          $region151: #{tpu_custom_call.1} parent=144 // loop_footer_branch
            %414 = sbr.rel target = $region147
          $region152: #{tpu_custom_call.1} parent=144 // loop_exit
            _
        $region145: #{tpu_custom_call.1} parent=129 // pred_fallthru
          _
      $region130: #{tpu_custom_call.1} parent=35 // pred_fallthru
        _
      // Predicated region
      $region131: #{tpu_custom_call.1} parent=35 // pred_check
        %p389 = pneg %p385
      $region132: #{tpu_custom_call.1} parent=35 // pred_check_branch
        %391 = sbr.rel (%p389) target = $region134
      $region133: #{tpu_custom_call.1} parent=35 // pred_region
        %s392 = sshllo.u32 0, 1
        loop: start=0, step=1, limit=1
        $region135: #{tpu_custom_call.1} parent=133 // loop_pre_header
          _
        $region136: #{tpu_custom_call.1} parent=133 // loop_header
          %s394 = sphi 0, %s398
          %p395 = scmp.ge.s32.totalorder %s394, 1
          %s399 = sphi %s381, %s381
          %s400 = sphi %s382, %s382
        $region137: #{tpu_custom_call.1} parent=133 // loop_header_branch
          %397 = sbr.rel (%p395) target = $region141
        $region138: #{tpu_custom_call.1} parent=133 // loop_body
          %v401 = vld [vmem:[%s399] sm:%s392]
          %402 = vst [vmem:[%s400] sm:%s392] %v401
        $region139: #{tpu_custom_call.1} parent=133 // loop_footer
          %s398 = sadd.s32 1, %s394
        $region140: #{tpu_custom_call.1} parent=133 // loop_footer_branch
          %393 = sbr.rel target = $region136
        $region141: #{tpu_custom_call.1} parent=133 // loop_exit
          _
      $region134: #{tpu_custom_call.1} parent=35 // pred_fallthru
        _
      // Predicated region
      $region153: #{tpu_custom_call.1} parent=35 // pred_check
        _
      $region154: #{tpu_custom_call.1} parent=35 // pred_check_branch
        %426 = sbr.rel (0) target = $region156
      $region155: #{tpu_custom_call.1} parent=35 // pred_region
        %427 = vsyncadd %s383, 16
      $region156: #{tpu_custom_call.1} parent=35 // pred_fallthru
        _
      %s428 = sadd.s32 %s206, 4
      %s429 = sshra.s32 %s428, 7
      %s430 = sand.u32 %s428, 127
      %s431 = sadd.s32 %s429, %s29
      %s432 = smul.u32 %s431, 128
      %s433 = sshra.s32 %s428, 7
      %s434 = sand.u32 %s428, 127
      %s435 = sadd.s32 %s432, %s434
      %s436 = sld [smem:[#allocation5 + %s435]]
      %s437 = scalar_lea.vmem %s1, %s436
      %s438 = scalar_lea.vmem [#allocation2], 4
      %s439 = scalar_lea.sflag [#allocation3], 4
      %p441 = scmp.lt.u32.totalorder 1, 8
      %p442 = pneg %p441
      // Predicated region
      $region157: #{tpu_custom_call.1} parent=35 // pred_check
        _
      $region158: #{tpu_custom_call.1} parent=35 // pred_check_branch
        %444 = sbr.rel (%p441) target = $region160
      $region159: #{tpu_custom_call.1} parent=35 // pred_region
        %s459 = sand.u32 1, 7
        %p460 = scmp.eq.s32.totalorder %s459, 0
        %p461 = pneg %p460
        // Predicated region
        $region172: #{tpu_custom_call.1} parent=159 // pred_check
          _
        $region173: #{tpu_custom_call.1} parent=159 // pred_check_branch
          %463 = sbr.rel (%p460) target = $region175
        $region174: #{tpu_custom_call.1} parent=159 // pred_region
          %s464 = sand.u32 1, 7
          %s465 = ssub.s32 1, %s464
          %s466 = scalar_lea.vmem %s437, %s465
          %s467 = ssub.s32 1, %s464
          %s468 = scalar_lea.vmem %s438, %s467 [#allocation2]
          %s469 = sshllo.u32 0, %s464
          loop: start=0, step=1, limit=1
          $region176: #{tpu_custom_call.1} parent=174 // loop_pre_header
            _
          $region177: #{tpu_custom_call.1} parent=174 // loop_header
            %s471 = sphi 0, %s475
            %p472 = scmp.ge.s32.totalorder %s471, 1
            %s476 = sphi %s466, %s466
            %s477 = sphi %s468, %s468
          $region178: #{tpu_custom_call.1} parent=174 // loop_header_branch
            %474 = sbr.rel (%p472) target = $region182
          $region179: #{tpu_custom_call.1} parent=174 // loop_body
            %v478 = vld [vmem:[%s476] sm:%s469]
            %479 = vst [vmem:[%s477] sm:%s469] %v478
          $region180: #{tpu_custom_call.1} parent=174 // loop_footer
            %s475 = sadd.s32 1, %s471
          $region181: #{tpu_custom_call.1} parent=174 // loop_footer_branch
            %470 = sbr.rel target = $region177
          $region182: #{tpu_custom_call.1} parent=174 // loop_exit
            _
        $region175: #{tpu_custom_call.1} parent=159 // pred_fallthru
          _
      $region160: #{tpu_custom_call.1} parent=35 // pred_fallthru
        _
      // Predicated region
      $region161: #{tpu_custom_call.1} parent=35 // pred_check
        %p445 = pneg %p441
      $region162: #{tpu_custom_call.1} parent=35 // pred_check_branch
        %447 = sbr.rel (%p445) target = $region164
      $region163: #{tpu_custom_call.1} parent=35 // pred_region
        %s448 = sshllo.u32 0, 1
        loop: start=0, step=1, limit=1
        $region165: #{tpu_custom_call.1} parent=163 // loop_pre_header
          _
        $region166: #{tpu_custom_call.1} parent=163 // loop_header
          %s450 = sphi 0, %s454
          %p451 = scmp.ge.s32.totalorder %s450, 1
          %s455 = sphi %s437, %s437
          %s456 = sphi %s438, %s438
        $region167: #{tpu_custom_call.1} parent=163 // loop_header_branch
          %453 = sbr.rel (%p451) target = $region171
        $region168: #{tpu_custom_call.1} parent=163 // loop_body
          %v457 = vld [vmem:[%s455] sm:%s448]
          %458 = vst [vmem:[%s456] sm:%s448] %v457
        $region169: #{tpu_custom_call.1} parent=163 // loop_footer
          %s454 = sadd.s32 1, %s450
        $region170: #{tpu_custom_call.1} parent=163 // loop_footer_branch
          %449 = sbr.rel target = $region166
        $region171: #{tpu_custom_call.1} parent=163 // loop_exit
          _
      $region164: #{tpu_custom_call.1} parent=35 // pred_fallthru
        _
      // Predicated region
      $region183: #{tpu_custom_call.1} parent=35 // pred_check
        _
      $region184: #{tpu_custom_call.1} parent=35 // pred_check_branch
        %482 = sbr.rel (0) target = $region186
      $region185: #{tpu_custom_call.1} parent=35 // pred_region
        %483 = vsyncadd %s439, 16
      $region186: #{tpu_custom_call.1} parent=35 // pred_fallthru
        _
      %s484 = sadd.s32 %s206, 5
      %s485 = sshra.s32 %s484, 7
      %s486 = sand.u32 %s484, 127
      %s487 = sadd.s32 %s485, %s29
      %s488 = smul.u32 %s487, 128
      %s489 = sshra.s32 %s484, 7
      %s490 = sand.u32 %s484, 127
      %s491 = sadd.s32 %s488, %s490
      %s492 = sld [smem:[#allocation5 + %s491]]
      %s493 = scalar_lea.vmem %s1, %s492
      %s494 = scalar_lea.vmem [#allocation2], 5
      %s495 = scalar_lea.sflag [#allocation3], 5
      %p497 = scmp.lt.u32.totalorder 1, 8
      %p498 = pneg %p497
      // Predicated region
      $region187: #{tpu_custom_call.1} parent=35 // pred_check
        _
      $region188: #{tpu_custom_call.1} parent=35 // pred_check_branch
        %500 = sbr.rel (%p497) target = $region190
      $region189: #{tpu_custom_call.1} parent=35 // pred_region
        %s515 = sand.u32 1, 7
        %p516 = scmp.eq.s32.totalorder %s515, 0
        %p517 = pneg %p516
        // Predicated region
        $region202: #{tpu_custom_call.1} parent=189 // pred_check
          _
        $region203: #{tpu_custom_call.1} parent=189 // pred_check_branch
          %519 = sbr.rel (%p516) target = $region205
        $region204: #{tpu_custom_call.1} parent=189 // pred_region
          %s520 = sand.u32 1, 7
          %s521 = ssub.s32 1, %s520
          %s522 = scalar_lea.vmem %s493, %s521
          %s523 = ssub.s32 1, %s520
          %s524 = scalar_lea.vmem %s494, %s523 [#allocation2]
          %s525 = sshllo.u32 0, %s520
          loop: start=0, step=1, limit=1
          $region206: #{tpu_custom_call.1} parent=204 // loop_pre_header
            _
          $region207: #{tpu_custom_call.1} parent=204 // loop_header
            %s527 = sphi 0, %s531
            %p528 = scmp.ge.s32.totalorder %s527, 1
            %s532 = sphi %s522, %s522
            %s533 = sphi %s524, %s524
          $region208: #{tpu_custom_call.1} parent=204 // loop_header_branch
            %530 = sbr.rel (%p528) target = $region212
          $region209: #{tpu_custom_call.1} parent=204 // loop_body
            %v534 = vld [vmem:[%s532] sm:%s525]
            %535 = vst [vmem:[%s533] sm:%s525] %v534
          $region210: #{tpu_custom_call.1} parent=204 // loop_footer
            %s531 = sadd.s32 1, %s527
          $region211: #{tpu_custom_call.1} parent=204 // loop_footer_branch
            %526 = sbr.rel target = $region207
          $region212: #{tpu_custom_call.1} parent=204 // loop_exit
            _
        $region205: #{tpu_custom_call.1} parent=189 // pred_fallthru
          _
      $region190: #{tpu_custom_call.1} parent=35 // pred_fallthru
        _
      // Predicated region
      $region191: #{tpu_custom_call.1} parent=35 // pred_check
        %p501 = pneg %p497
      $region192: #{tpu_custom_call.1} parent=35 // pred_check_branch
        %503 = sbr.rel (%p501) target = $region194
      $region193: #{tpu_custom_call.1} parent=35 // pred_region
        %s504 = sshllo.u32 0, 1
        loop: start=0, step=1, limit=1
        $region195: #{tpu_custom_call.1} parent=193 // loop_pre_header
          _
        $region196: #{tpu_custom_call.1} parent=193 // loop_header
          %s506 = sphi 0, %s510
          %p507 = scmp.ge.s32.totalorder %s506, 1
          %s511 = sphi %s493, %s493
          %s512 = sphi %s494, %s494
        $region197: #{tpu_custom_call.1} parent=193 // loop_header_branch
          %509 = sbr.rel (%p507) target = $region201
        $region198: #{tpu_custom_call.1} parent=193 // loop_body
          %v513 = vld [vmem:[%s511] sm:%s504]
          %514 = vst [vmem:[%s512] sm:%s504] %v513
        $region199: #{tpu_custom_call.1} parent=193 // loop_footer
          %s510 = sadd.s32 1, %s506
        $region200: #{tpu_custom_call.1} parent=193 // loop_footer_branch
          %505 = sbr.rel target = $region196
        $region201: #{tpu_custom_call.1} parent=193 // loop_exit
          _
      $region194: #{tpu_custom_call.1} parent=35 // pred_fallthru
        _
      // Predicated region
      $region213: #{tpu_custom_call.1} parent=35 // pred_check
        _
      $region214: #{tpu_custom_call.1} parent=35 // pred_check_branch
        %538 = sbr.rel (0) target = $region216
      $region215: #{tpu_custom_call.1} parent=35 // pred_region
        %539 = vsyncadd %s495, 16
      $region216: #{tpu_custom_call.1} parent=35 // pred_fallthru
        _
      %s540 = sadd.s32 %s206, 6
      %s541 = sshra.s32 %s540, 7
      %s542 = sand.u32 %s540, 127
      %s543 = sadd.s32 %s541, %s29
      %s544 = smul.u32 %s543, 128
      %s545 = sshra.s32 %s540, 7
      %s546 = sand.u32 %s540, 127
      %s547 = sadd.s32 %s544, %s546
      %s548 = sld [smem:[#allocation5 + %s547]]
      %s549 = scalar_lea.vmem %s1, %s548
      %s550 = scalar_lea.vmem [#allocation2], 6
      %s551 = scalar_lea.sflag [#allocation3], 6
      %p553 = scmp.lt.u32.totalorder 1, 8
      %p554 = pneg %p553
      // Predicated region
      $region217: #{tpu_custom_call.1} parent=35 // pred_check
        _
      $region218: #{tpu_custom_call.1} parent=35 // pred_check_branch
        %556 = sbr.rel (%p553) target = $region220
      $region219: #{tpu_custom_call.1} parent=35 // pred_region
        %s571 = sand.u32 1, 7
        %p572 = scmp.eq.s32.totalorder %s571, 0
        %p573 = pneg %p572
        // Predicated region
        $region232: #{tpu_custom_call.1} parent=219 // pred_check
          _
        $region233: #{tpu_custom_call.1} parent=219 // pred_check_branch
          %575 = sbr.rel (%p572) target = $region235
        $region234: #{tpu_custom_call.1} parent=219 // pred_region
          %s576 = sand.u32 1, 7
          %s577 = ssub.s32 1, %s576
          %s578 = scalar_lea.vmem %s549, %s577
          %s579 = ssub.s32 1, %s576
          %s580 = scalar_lea.vmem %s550, %s579 [#allocation2]
          %s581 = sshllo.u32 0, %s576
          loop: start=0, step=1, limit=1
          $region236: #{tpu_custom_call.1} parent=234 // loop_pre_header
            _
          $region237: #{tpu_custom_call.1} parent=234 // loop_header
            %s583 = sphi 0, %s587
            %p584 = scmp.ge.s32.totalorder %s583, 1
            %s588 = sphi %s578, %s578
            %s589 = sphi %s580, %s580
          $region238: #{tpu_custom_call.1} parent=234 // loop_header_branch
            %586 = sbr.rel (%p584) target = $region242
          $region239: #{tpu_custom_call.1} parent=234 // loop_body
            %v590 = vld [vmem:[%s588] sm:%s581]
            %591 = vst [vmem:[%s589] sm:%s581] %v590
          $region240: #{tpu_custom_call.1} parent=234 // loop_footer
            %s587 = sadd.s32 1, %s583
          $region241: #{tpu_custom_call.1} parent=234 // loop_footer_branch
            %582 = sbr.rel target = $region237
          $region242: #{tpu_custom_call.1} parent=234 // loop_exit
            _
        $region235: #{tpu_custom_call.1} parent=219 // pred_fallthru
          _
      $region220: #{tpu_custom_call.1} parent=35 // pred_fallthru
        _
      // Predicated region
      $region221: #{tpu_custom_call.1} parent=35 // pred_check
        %p557 = pneg %p553
      $region222: #{tpu_custom_call.1} parent=35 // pred_check_branch
        %559 = sbr.rel (%p557) target = $region224
      $region223: #{tpu_custom_call.1} parent=35 // pred_region
        %s560 = sshllo.u32 0, 1
        loop: start=0, step=1, limit=1
        $region225: #{tpu_custom_call.1} parent=223 // loop_pre_header
          _
        $region226: #{tpu_custom_call.1} parent=223 // loop_header
          %s562 = sphi 0, %s566
          %p563 = scmp.ge.s32.totalorder %s562, 1
          %s567 = sphi %s549, %s549
          %s568 = sphi %s550, %s550
        $region227: #{tpu_custom_call.1} parent=223 // loop_header_branch
          %565 = sbr.rel (%p563) target = $region231
        $region228: #{tpu_custom_call.1} parent=223 // loop_body
          %v569 = vld [vmem:[%s567] sm:%s560]
          %570 = vst [vmem:[%s568] sm:%s560] %v569
        $region229: #{tpu_custom_call.1} parent=223 // loop_footer
          %s566 = sadd.s32 1, %s562
        $region230: #{tpu_custom_call.1} parent=223 // loop_footer_branch
          %561 = sbr.rel target = $region226
        $region231: #{tpu_custom_call.1} parent=223 // loop_exit
          _
      $region224: #{tpu_custom_call.1} parent=35 // pred_fallthru
        _
      // Predicated region
      $region243: #{tpu_custom_call.1} parent=35 // pred_check
        _
      $region244: #{tpu_custom_call.1} parent=35 // pred_check_branch
        %594 = sbr.rel (0) target = $region246
      $region245: #{tpu_custom_call.1} parent=35 // pred_region
        %595 = vsyncadd %s551, 16
      $region246: #{tpu_custom_call.1} parent=35 // pred_fallthru
        _
      %s596 = sadd.s32 %s206, 7
      %s597 = sshra.s32 %s596, 7
      %s598 = sand.u32 %s596, 127
      %s599 = sadd.s32 %s597, %s29
      %s600 = smul.u32 %s599, 128
      %s601 = sshra.s32 %s596, 7
      %s602 = sand.u32 %s596, 127
      %s603 = sadd.s32 %s600, %s602
      %s604 = sld [smem:[#allocation5 + %s603]]
      %s605 = scalar_lea.vmem %s1, %s604
      %s606 = scalar_lea.vmem [#allocation2], 7
      %s607 = scalar_lea.sflag [#allocation3], 7
      %p609 = scmp.lt.u32.totalorder 1, 8
      %p610 = pneg %p609
      // Predicated region
      $region247: #{tpu_custom_call.1} parent=35 // pred_check
        _
      $region248: #{tpu_custom_call.1} parent=35 // pred_check_branch
        %612 = sbr.rel (%p609) target = $region250
      $region249: #{tpu_custom_call.1} parent=35 // pred_region
        %s627 = sand.u32 1, 7
        %p628 = scmp.eq.s32.totalorder %s627, 0
        %p629 = pneg %p628
        // Predicated region
        $region262: #{tpu_custom_call.1} parent=249 // pred_check
          _
        $region263: #{tpu_custom_call.1} parent=249 // pred_check_branch
          %631 = sbr.rel (%p628) target = $region265
        $region264: #{tpu_custom_call.1} parent=249 // pred_region
          %s632 = sand.u32 1, 7
          %s633 = ssub.s32 1, %s632
          %s634 = scalar_lea.vmem %s605, %s633
          %s635 = ssub.s32 1, %s632
          %s636 = scalar_lea.vmem %s606, %s635 [#allocation2]
          %s637 = sshllo.u32 0, %s632
          loop: start=0, step=1, limit=1
          $region266: #{tpu_custom_call.1} parent=264 // loop_pre_header
            _
          $region267: #{tpu_custom_call.1} parent=264 // loop_header
            %s639 = sphi 0, %s643
            %p640 = scmp.ge.s32.totalorder %s639, 1
            %s644 = sphi %s634, %s634
            %s645 = sphi %s636, %s636
          $region268: #{tpu_custom_call.1} parent=264 // loop_header_branch
            %642 = sbr.rel (%p640) target = $region272
          $region269: #{tpu_custom_call.1} parent=264 // loop_body
            %v646 = vld [vmem:[%s644] sm:%s637]
            %647 = vst [vmem:[%s645] sm:%s637] %v646
          $region270: #{tpu_custom_call.1} parent=264 // loop_footer
            %s643 = sadd.s32 1, %s639
          $region271: #{tpu_custom_call.1} parent=264 // loop_footer_branch
            %638 = sbr.rel target = $region267
          $region272: #{tpu_custom_call.1} parent=264 // loop_exit
            _
        $region265: #{tpu_custom_call.1} parent=249 // pred_fallthru
          _
      $region250: #{tpu_custom_call.1} parent=35 // pred_fallthru
        _
      // Predicated region
      $region251: #{tpu_custom_call.1} parent=35 // pred_check
        %p613 = pneg %p609
      $region252: #{tpu_custom_call.1} parent=35 // pred_check_branch
        %615 = sbr.rel (%p613) target = $region254
      $region253: #{tpu_custom_call.1} parent=35 // pred_region
        %s616 = sshllo.u32 0, 1
        loop: start=0, step=1, limit=1
        $region255: #{tpu_custom_call.1} parent=253 // loop_pre_header
          _
        $region256: #{tpu_custom_call.1} parent=253 // loop_header
          %s618 = sphi 0, %s622
          %p619 = scmp.ge.s32.totalorder %s618, 1
          %s623 = sphi %s605, %s605
          %s624 = sphi %s606, %s606
        $region257: #{tpu_custom_call.1} parent=253 // loop_header_branch
          %621 = sbr.rel (%p619) target = $region261
        $region258: #{tpu_custom_call.1} parent=253 // loop_body
          %v625 = vld [vmem:[%s623] sm:%s616]
          %626 = vst [vmem:[%s624] sm:%s616] %v625
        $region259: #{tpu_custom_call.1} parent=253 // loop_footer
          %s622 = sadd.s32 1, %s618
        $region260: #{tpu_custom_call.1} parent=253 // loop_footer_branch
          %617 = sbr.rel target = $region256
        $region261: #{tpu_custom_call.1} parent=253 // loop_exit
          _
      $region254: #{tpu_custom_call.1} parent=35 // pred_fallthru
        _
      // Predicated region
      $region273: #{tpu_custom_call.1} parent=35 // pred_check
        _
      $region274: #{tpu_custom_call.1} parent=35 // pred_check_branch
        %650 = sbr.rel (0) target = $region276
      $region275: #{tpu_custom_call.1} parent=35 // pred_region
        %651 = vsyncadd %s607, 16
      $region276: #{tpu_custom_call.1} parent=35 // pred_fallthru
        _
      %s652 = smul.u32 1, 1
      %s653 = sshll.u32 %s652, 4
      %654 = dma.done [#allocation3], %s653
      %s655 = sshll.u32 %s652, 4
      %656 = dma.done %s271, %s655
      %s657 = sshll.u32 %s652, 4
      %658 = dma.done %s327, %s657
      %s659 = sshll.u32 %s652, 4
      %660 = dma.done %s383, %s659
      %s661 = sshll.u32 %s652, 4
      %662 = dma.done %s439, %s661
      %s663 = sshll.u32 %s652, 4
      %664 = dma.done %s495, %s663
      %s665 = sshll.u32 %s652, 4
      %666 = dma.done %s551, %s665
      %s667 = sshll.u32 %s652, 4
      %668 = dma.done %s607, %s667
      %v669 = vld [vmem:[#allocation2] sm:$0xff]
      %v670 = vld [vmem:[%s2] sm:$0xff]
      %v671 = vld [vmem:[%s2 + $0x8] sm:$0xff]
      %v672 = vld [vmem:[%s2 + $0x10] sm:$0xff]
      %v673 = vld [vmem:[%s2 + $0x18] sm:$0xff]
      %v674 = vld [vmem:[%s3] sm:$0x1]
      %v676 = vlaneseq
      %v677 = vshrl.u32 %v676, 7
      %v678 = vsub.s32 0, %v677
      %v679 = vrot.slane %v674, %v678
      %vm681 = vcmask 261120
      %v683 = vsel %vm681, %v669, 0
      %685 = vmatprep.subr.mxu0 0.0
      %686 = vmatpush1.msra.mxu0 %v670
      %687 = vmatprep.subr.mxu0 0.0
      %688 = vmatpush1.msra.mxu0 %v671
      %689 = vmatprep.subr.mxu0 0.0
      %690 = vmatpush1.msra.mxu0 %v672
      %691 = vmatprep.subr.mxu0 0.0
      %692 = vmatpush1.msra.mxu0 %v673
      %693 = vmatprep.subr.mxu0 0.0
      %694 = vmatpush1.msra.mxu0 0.0
      %695 = vmatprep.subr.mxu0 0.0
      %696 = vmatpush1.msra.mxu0 0.0
      %697 = vmatprep.subr.mxu0 0.0
      %698 = vmatpush1.msra.mxu0 0.0
      %699 = vmatprep.subr.mxu0 0.0
      %700 = vmatpush1.msra.mxu0 0.0
      %701 = vmatprep.subr.mxu0 0.0
      %702 = vmatpush1.msra.mxu0 0.0
      %703 = vmatprep.subr.mxu0 0.0
      %704 = vmatpush1.msra.mxu0 0.0
      %705 = vmatprep.subr.mxu0 0.0
      %706 = vmatpush1.msra.mxu0 0.0
      %707 = vmatprep.subr.mxu0 0.0
      %708 = vmatpush1.msra.mxu0 0.0
      %709 = vmatprep.subr.mxu0 0.0
      %710 = vmatpush1.msra.mxu0 0.0
      %711 = vmatprep.subr.mxu0 0.0
      %712 = vmatpush1.msra.mxu0 0.0
      %713 = vmatprep.subr.mxu0 0.0
      %714 = vmatpush1.msra.mxu0 0.0
      %715 = vmatprep.subr.mxu0 0.0
      %716 = vmatpush1.msra.mxu0 0.0
      %717 = vmatprep.subr.mxu0 0.0
      %718 = vmatpush1.msra.mxu0 0.0
      %719 = vmatprep.subr.mxu0 0.0
      %720 = vmatpush1.msra.mxu0 0.0
      %721 = vmatprep.subr.mxu0 0.0
      %722 = vmatpush1.msra.mxu0 0.0
      %723 = vmatprep.subr.mxu0 0.0
      %724 = vmatpush1.msra.mxu0 0.0
      %725 = vmatprep.subr.mxu0 0.0
      %726 = vmatpush1.msra.mxu0 0.0
      %727 = vmatprep.subr.mxu0 0.0
      %728 = vmatpush1.msra.mxu0 0.0
      %729 = vmatprep.subr.mxu0 0.0
      %730 = vmatpush1.msra.mxu0 0.0
      %731 = vmatprep.subr.mxu0 0.0
      %732 = vmatpush1.msra.mxu0 0.0
      %733 = vmatprep.subr.mxu0 0.0
      %734 = vmatpush1.msra.mxu0 0.0
      %735 = vmatprep.subr.mxu0 0.0
      %736 = vmatpush1.msra.mxu0 0.0
      %737 = vmatprep.subr.mxu0 0.0
      %738 = vmatpush1.msra.mxu0 0.0
      %739 = vmatprep.subr.mxu0 0.0
      %740 = vmatpush1.msra.mxu0 0.0
      %741 = vmatprep.subr.mxu0 0.0
      %742 = vmatpush1.msra.mxu0 0.0
      %743 = vmatprep.subr.mxu0 0.0
      %744 = vmatpush1.msra.mxu0 0.0
      %745 = vmatprep.subr.mxu0 0.0
      %746 = vmatpush1.msra.mxu0 0.0
      %747 = vmatprep.subr.mxu0 0.0
      %748 = vmatpush1.msra.mxu0 0.0
      %749 = vmatprep.mubr.f32.mxu0 0.0
      %750 = vmatmul.mubr.f32.gmra.mrb[0].mxu0 %v683
      %v751 = vpop.f32.mrb[0].mxu0
      %v752 = vadd.f32 %v679, %v751
      %v753 = vpop.f32.mrb[0].mxu0
      %754 = vdwg.mxu0
      %v755 = vtanh.pop %v752
      %v756 = vld [vmem:[%s4] sm:$0x1]
      %v758 = vlaneseq
      %v759 = vshrl.u32 %v758, 7
      %v760 = vsub.s32 0, %v759
      %v761 = vrot.slane %v756, %v760
      %v763 = vmul.f32 %v755, %v761
      %v764 = vsel %vm681, %v763, 0.0
      %765 = vadd.xlane.f32.xlu0 %v764
      %v766 = vpop.xlane.xlu0 %765
      %v767 = vld [vmem:[#allocation6] sm:$0x1]
      %v769 = vlaneseq
      %v770 = vshrl.u32 %v769, 7
      %v771 = vsub.s32 0, %v770
      %v772 = vrot.slane %v767, %v771
      %v774 = vadd.f32 %v766, %v772
      %vm775 = vcmask 7168
      %776 = vst.msk [vmem:[%s205] sm:$0xff] %vm775, %v774
      %p777 = scmp.lt.s32.totalorder %s29, 1
      %s778 = scalar_select %p777, %s29, 1
      %p779 = scmp.lt.s32.totalorder %s30, 0
      %s780 = scalar_select %p779, %s30, 0
      %s781 = sadd.s32 %s780, %s778
      %s782 = smul.addr %s781, 8
      %s783 = scalar_lea.vmem %s6, %s782
      // Predicated region
      $region277: #{tpu_custom_call.1} parent=35 // pred_check
        %p784 = pneg %p141
      $region278: #{tpu_custom_call.1} parent=35 // pred_check_branch
        %786 = sbr.rel (%p784) target = $region280
      $region279: #{tpu_custom_call.1} parent=35 // pred_region
        _
      $region280: #{tpu_custom_call.1} parent=35 // pred_fallthru
        _
    $region36: #{tpu_custom_call.1} parent=5 // pred_fallthru
      _
    %p787 = scmp.le.s32.totalorder 2, %s20
    // Predicated region
    $region281: #{tpu_custom_call.1} parent=5 // pred_check
      %p788 = pneg %p787
    $region282: #{tpu_custom_call.1} parent=5 // pred_check_branch
      %790 = sbr.rel (%p788) target = $region284
    $region283: #{tpu_custom_call.1} parent=5 // pred_region
      %s791 = ssub.s32 %s20, 2
      // Predicated region
      $region285: #{tpu_custom_call.1} parent=283 // pred_check
        %p792 = pneg %p147
      $region286: #{tpu_custom_call.1} parent=283 // pred_check_branch
        %794 = sbr.rel (%p792) target = $region288
      $region287: #{tpu_custom_call.1} parent=283 // pred_region
        %p795 = scmp.lt.s32.totalorder %s31, 1
        %s796 = scalar_select %p795, %s31, 1
        %p797 = scmp.lt.s32.totalorder %s32, 0
        %s798 = scalar_select %p797, %s32, 0
        %s799 = sadd.s32 %s798, %s796
        %s800 = smul.addr %s799, 8
        %s801 = scalar_lea.vmem %s6, %s800
      $region288: #{tpu_custom_call.1} parent=283 // pred_fallthru
        _
    $region284: #{tpu_custom_call.1} parent=5 // pred_fallthru
      _
  $region6: #{tpu_custom_call.1} parent=0 // loop_footer
    %s24 = sadd.s32 1, %s20
  $region7: #{tpu_custom_call.1} parent=0 // loop_footer_branch
    %19 = sbr.rel target = $region3
  $region8: #{tpu_custom_call.1} parent=0 // loop_exit
    _
  %802 = vsyncmov [#allocation3]
  %s803 = vpop.sfrf %802
  %p804 = scmp.eq.s32.totalorder %s803, 0
  %p805 = pneg %p804
  %807 = shalt.err (%p805)
  %s808 = scalar_lea.sflag [#allocation3], 1
  %809 = vsyncmov %s808
  %s810 = vpop.sfrf %809
  %p811 = scmp.eq.s32.totalorder %s810, 0
  %p812 = pneg %p811
  %814 = shalt.err (%p812)
  %s815 = scalar_lea.sflag [#allocation3], 2
  %816 = vsyncmov %s815
  %s817 = vpop.sfrf %816
  %p818 = scmp.eq.s32.totalorder %s817, 0
  %p819 = pneg %p818
  %821 = shalt.err (%p819)
  %s822 = scalar_lea.sflag [#allocation3], 3
  %823 = vsyncmov %s822
  %s824 = vpop.sfrf %823
  %p825 = scmp.eq.s32.totalorder %s824, 0
  %p826 = pneg %p825
  %828 = shalt.err (%p826)
  %s829 = scalar_lea.sflag [#allocation3], 4
  %830 = vsyncmov %s829
  %s831 = vpop.sfrf %830
  %p832 = scmp.eq.s32.totalorder %s831, 0
  %p833 = pneg %p832
  %835 = shalt.err (%p833)
  %s836 = scalar_lea.sflag [#allocation3], 5
  %837 = vsyncmov %s836
  %s838 = vpop.sfrf %837
  %p839 = scmp.eq.s32.totalorder %s838, 0
  %p840 = pneg %p839
  %842 = shalt.err (%p840)
  %s843 = scalar_lea.sflag [#allocation3], 6
  %844 = vsyncmov %s843
  %s845 = vpop.sfrf %844
  %p846 = scmp.eq.s32.totalorder %s845, 0
  %p847 = pneg %p846
  %849 = shalt.err (%p847)
  %s850 = scalar_lea.sflag [#allocation3], 7
  %851 = vsyncmov %s850
  %s852 = vpop.sfrf %851
  %p853 = scmp.eq.s32.totalorder %s852, 0
  %p854 = pneg %p853
  %856 = shalt.err (%p854)

</llo_original>
